<compile_context>
chip_gen: v7x
topology: tpu7x:2x2x1
jax: 0.10.0
libtpu: 0.0.40
codegen_flags: <defaults>
</compile_context>

<pallas_src>
import functools

import jax
import jax.numpy as jnp
from jax import lax
from jax.experimental import pallas as pl
from jax.experimental.pallas import tpu as pltpu


def _fc_kernel(p_ref, w_ref, cb_ref, wmt_ref, bm_ref, o_ref, *, alpha, tb, hw, hw_pad):
    # p_ref:   (1, K_pad, TB*HW_pad)  im2col patches, TB samples concatenated on lanes
    # w_ref:   (F, K_pad)             conv weights with BN scale folded in
    # cb_ref:  (1, F)                 folded conv-bias + BN-bias (lane-major row)
    # wmt_ref: (F, F)                 MLP Linear weight, transposed (in x out)
    # bm_ref:  (1, F)                 MLP Linear bias (lane-major row)
    # o_ref:   (1, TB, F)             fc output for this chunk of the batch
    f = w_ref.shape[0]

    # Whole conv for the TB-sample chunk = one MXU matmul; lane dim = TB*HW_pad.
    conv = jnp.dot(w_ref[...], p_ref[0],
                   preferred_element_type=jnp.float32)              # (F, TB*HW_pad)

    # Per-sample global max pool: lane split is clean because HW_pad % 128 == 0,
    # so samples never mix and no relayout copy is forced.
    conv = conv.reshape(f, tb, hw_pad)                               # (F, TB, HW_pad)
    if hw_pad != hw:
        col = lax.broadcasted_iota(jnp.int32, (f, tb, hw_pad), 2)
        conv = jnp.where(col < hw, conv, -jnp.inf)                   # ignore padded cols
    m = jnp.max(conv, axis=2)                                        # (F, TB)

    # ReLU is monotone and the (conv + BN) bias is a per-channel constant, so
    #   max_hw ReLU(conv + cb) == ReLU(max_hw(conv) + cb)
    # -> bias + ReLU on the tiny (TB, F) block instead of the (F, TB*HW) slab.
    feat = jnp.maximum(m.T + cb_ref[...], 0.0)                       # (TB, F)

    # MLP: Linear (y = x @ W^T + b) then ELU, then the alpha blend; F stays on lanes.
    z = jnp.dot(feat, wmt_ref[...],
                preferred_element_type=jnp.float32) + bm_ref[...]    # (TB, F)
    elu = jnp.where(z > 0.0, z, jnp.exp(jnp.minimum(z, 0.0)) - 1.0)
    o_ref[0] = (alpha * feat + (1.0 - alpha) * elu).astype(o_ref.dtype)


def fc_forward(x_nchw, conv_w, conv_b, gamma, beta, running_mean, running_var,
               mlp_w, mlp_b, *, padding=1, eps=1e-5, alpha=0.3, tb_max=8):
    """Full fc forward (non-resnet branch). Returns (N, feature_size)."""
    N, Cin, H, W = x_nchw.shape
    Cout, _, KH, KW = conv_w.shape
    Ho = H + 2 * padding - KH + 1
    Wo = W + 2 * padding - KW + 1
    HW = Ho * Wo
    F = Cout  # feature_size == conv out_planes == Linear in/out features

    # ---- wrapper glue: layout + im2col + BN folding (plain JAX) ----
    x = jnp.transpose(x_nchw, (0, 2, 3, 1)).astype(jnp.float32)      # NHWC
    x = jnp.pad(x, ((0, 0), (padding, padding), (padding, padding), (0, 0)))

    taps = [x[:, kh:kh + Ho, kw:kw + Wo, :] for kh in range(KH) for kw in range(KW)]
    P = jnp.stack(taps, axis=0)                                      # (KH*KW, N, Ho, Wo, Cin)
    P = jnp.transpose(P, (1, 4, 0, 2, 3))                            # (N, Cin, KH*KW, Ho, Wo)
    P = P.reshape(N, Cin * KH * KW, HW)                              # K idx = cin*KH*KW + kh*KW + kw

    inv_std = 1.0 / jnp.sqrt(running_var.astype(jnp.float32) + eps)
    scale = gamma.astype(jnp.float32) * inv_std                      # (Cout,)
    w2 = (conv_w.astype(jnp.float32) * scale[:, None, None, None]
          ).reshape(Cout, Cin * KH * KW)                             # BN scale folded into weights
    cb = ((conv_b.astype(jnp.float32) - running_mean.astype(jnp.float32)) * scale
          + beta.astype(jnp.float32)).reshape(1, F)                  # folded conv+BN bias (row)
    wmt = mlp_w.astype(jnp.float32).T                                # (F_in, F_out)
    bm = mlp_b.astype(jnp.float32).reshape(1, F)

    # Pad contraction dim to x8 sublanes and the spatial lane dim to x128 lanes.
    K = Cin * KH * KW
    K_pad = -(-K // 8) * 8
    HW_pad = -(-HW // 128) * 128
    if K_pad != K or HW_pad != HW:
        P = jnp.pad(P, ((0, 0), (0, K_pad - K), (0, HW_pad - HW)))
        w2 = jnp.pad(w2, ((0, 0), (0, K_pad - K)))

    # Batch chunk per grid step: amortizes per-step overhead and widens the matmul
    # lane dim; keep >= 2 grid steps when N >= 2 so v7x's two TCs both get work.
    if N <= 1:
        TB = 1
    else:
        TB = max(1, min(tb_max, -(-N // 2)))
    num_chunks = -(-N // TB)
    N_pad = num_chunks * TB
    if N_pad != N:
        P = jnp.pad(P, ((0, N_pad - N), (0, 0), (0, 0)))

    # (N_pad, K_pad, HW_pad) -> (chunks, K_pad, TB*HW_pad): TB samples along lanes.
    P = P.reshape(num_chunks, TB, K_pad, HW_pad)
    P = jnp.transpose(P, (0, 2, 1, 3)).reshape(num_chunks, K_pad, TB * HW_pad)

    out = pl.pallas_call(
        functools.partial(_fc_kernel, alpha=alpha, tb=TB, hw=HW, hw_pad=HW_pad),
        out_shape=jax.ShapeDtypeStruct((num_chunks, TB, F), jnp.float32),
        grid_spec=pltpu.PrefetchScalarGridSpec(
            num_scalar_prefetch=0,
            grid=(num_chunks,),
            in_specs=[
                pl.BlockSpec((1, K_pad, TB * HW_pad), lambda n: (n, 0, 0)),
                pl.BlockSpec((F, K_pad), lambda n: (0, 0)),
                pl.BlockSpec((1, F), lambda n: (0, 0)),
                pl.BlockSpec((F, F), lambda n: (0, 0)),
                pl.BlockSpec((1, F), lambda n: (0, 0)),
            ],
            out_specs=pl.BlockSpec((1, TB, F), lambda n: (n, 0, 0)),
        ),
        compiler_params=pltpu.CompilerParams(
            dimension_semantics=("parallel",),
        ),
    )(P, w2, cb, wmt, bm)

    return out.reshape(N_pad, F)[:N]


def _reference(x_nchw, conv_w, conv_b, gamma, beta, running_mean, running_var,
               mlp_w, mlp_b, *, padding=1, eps=1e-5, alpha=0.3):
    y = lax.conv_general_dilated(
        x_nchw.astype(jnp.float32), conv_w.astype(jnp.float32),
        window_strides=(1, 1),
        padding=[(padding, padding), (padding, padding)],
        dimension_numbers=("NCHW", "OIHW", "NCHW"))
    y = y + conv_b.reshape(1, -1, 1, 1)
    inv_std = 1.0 / jnp.sqrt(running_var + eps)
    y = ((y - running_mean.reshape(1, -1, 1, 1))
         * (gamma * inv_std).reshape(1, -1, 1, 1)
         + beta.reshape(1, -1, 1, 1))
    y = jnp.maximum(y, 0.0)                                          # BasicConv output
    f = jnp.max(y, axis=(2, 3))                                      # AdaptiveMaxPool2d((1,1)) + view
    z = f @ mlp_w.T + mlp_b
    elu = jnp.where(z > 0.0, z, jnp.exp(jnp.minimum(z, 0.0)) - 1.0)
    return alpha * f + (1.0 - alpha) * elu


if __name__ == "__main__":
    key = jax.random.PRNGKey(0)
    ks = jax.random.split(key, 9)

    N, Cin, H, W = 2, 4, 16, 16
    F = 64                      # feature_size (non-resnet branch)
    KH = KW = 3
    padding = 1

    x = jax.random.normal(ks[0], (N, Cin, H, W), dtype=jnp.float32)
    conv_w = jax.random.normal(ks[1], (F, Cin, KH, KW), dtype=jnp.float32) * 0.1
    conv_b = 0.1 * jax.random.normal(ks[2], (F,), dtype=jnp.float32)
    gamma = 1.0 + 0.1 * jax.random.normal(ks[3], (F,), dtype=jnp.float32)
    beta = 0.1 * jax.random.normal(ks[4], (F,), dtype=jnp.float32)
    running_mean = 0.05 * jax.random.normal(ks[5], (F,), dtype=jnp.float32)
    running_var = 0.5 + jax.random.uniform(ks[6], (F,), dtype=jnp.float32)
    mlp_w = jax.random.normal(ks[7], (F, F), dtype=jnp.float32) * 0.1
    mlp_b = 0.1 * jax.random.normal(ks[8], (F,), dtype=jnp.float32)

    out = fc_forward(x, conv_w, conv_b, gamma, beta, running_mean, running_var,
                     mlp_w, mlp_b, padding=padding)
    out = jax.block_until_ready(out)

    ref = _reference(x, conv_w, conv_b, gamma, beta, running_mean, running_var,
                     mlp_w, mlp_b, padding=padding)

    assert out.shape == (N, F), out.shape
    assert jnp.allclose(out, ref, atol=1e-4, rtol=1e-4), float(jnp.abs(out - ref).max())

    print("KERNEL_OK")
</pallas_src>

<mosaic_0001>
module attributes {stable_mosaic.version = 11 : i64} {
  func.func @_fc_kernel(%arg0: i32, %arg1: memref<1x40x256xf32, #tpu.memory_space<vmem>>, %arg2: memref<64x40xf32, #tpu.memory_space<vmem>>, %arg3: memref<1x64xf32, #tpu.memory_space<vmem>>, %arg4: memref<64x64xf32, #tpu.memory_space<vmem>>, %arg5: memref<1x64xf32, #tpu.memory_space<vmem>>, %arg6: memref<1x1x64xf32, #tpu.memory_space<vmem>>) attributes {dimension_semantics = [#tpu.dimension_semantics<parallel>], iteration_bounds = array<i64: 2>, scalar_prefetch = 0 : i64, scratch_operands = 0 : i64, tpu.core_type = #tpu.core_type<tc>, window_params = [{transform_indices = @transform_0, window_bounds = array<i64: 1, 40, 256>}, {pipeline_mode = #tpu.pipeline_mode<synchronous>, transform_indices = @transform_1, window_bounds = array<i64: 64, 40>}, {pipeline_mode = #tpu.pipeline_mode<synchronous>, transform_indices = @transform_2, window_bounds = array<i64: 1, 64>}, {pipeline_mode = #tpu.pipeline_mode<synchronous>, transform_indices = @transform_3, window_bounds = array<i64: 64, 64>}, {pipeline_mode = #tpu.pipeline_mode<synchronous>, transform_indices = @transform_4, window_bounds = array<i64: 1, 64>}, {transform_indices = @transform_5, window_bounds = array<i64: 1, 1, 64>}]} {
    %c0 = arith.constant 0 : index
    %c0_0 = arith.constant 0 : index
    %0 = vector.load %arg2[%c0, %c0_0] : memref<64x40xf32, #tpu.memory_space<vmem>>, vector<64x40xf32>
    %c0_1 = arith.constant 0 : index
    %c0_2 = arith.constant 0 : index
    %c0_3 = arith.constant 0 : index
    %1 = vector.load %arg1[%c0_1, %c0_2, %c0_3] : memref<1x40x256xf32, #tpu.memory_space<vmem>>, vector<1x40x256xf32>
    %2 = vector.shape_cast %1 : vector<1x40x256xf32> to vector<40x256xf32>
    %cst = arith.constant dense<0.000000e+00> : vector<64x256xf32>
    %3 = tpu.matmul %0, %2, %cst {dimension_numbers = #tpu.dot_dimension_numbers<[1], [0], [0], [1], [0, 0, 1, 1], [], []>} : vector<64x40xf32>, vector<40x256xf32>, vector<64x256xf32> -> vector<64x256xf32>
    %4 = vector.shape_cast %3 : vector<64x256xf32> to vector<64x1x256xf32>
    %cst_4 = arith.constant dense<0xFF800000> : vector<64x1xf32>
    %5 = vector.multi_reduction <maximumf>, %4, %cst_4 [2] : vector<64x1x256xf32> to vector<64x1xf32>
    %6 = tpu.transpose %5, [1, 0] : vector<64x1xf32> -> vector<1x64xf32>
    %c0_5 = arith.constant 0 : index
    %c0_6 = arith.constant 0 : index
    %7 = vector.load %arg3[%c0_5, %c0_6] : memref<1x64xf32, #tpu.memory_space<vmem>>, vector<1x64xf32>
    %8 = arith.addf %6, %7 : vector<1x64xf32>
    %cst_7 = arith.constant 0.000000e+00 : f32
    %9 = vector.broadcast %cst_7 : f32 to vector<1x64xf32>
    %10 = arith.maximumf %8, %9 : vector<1x64xf32>
    %c0_8 = arith.constant 0 : index
    %c0_9 = arith.constant 0 : index
    %11 = vector.load %arg4[%c0_8, %c0_9] : memref<64x64xf32, #tpu.memory_space<vmem>>, vector<64x64xf32>
    %cst_10 = arith.constant dense<0.000000e+00> : vector<1x64xf32>
    %12 = tpu.matmul %10, %11, %cst_10 {dimension_numbers = #tpu.dot_dimension_numbers<[1], [0], [0], [1], [0, 0, 1, 1], [], []>} : vector<1x64xf32>, vector<64x64xf32>, vector<1x64xf32> -> vector<1x64xf32>
    %c0_11 = arith.constant 0 : index
    %c0_12 = arith.constant 0 : index
    %13 = vector.load %arg5[%c0_11, %c0_12] : memref<1x64xf32, #tpu.memory_space<vmem>>, vector<1x64xf32>
    %14 = arith.addf %12, %13 : vector<1x64xf32>
    %cst_13 = arith.constant 0.000000e+00 : f32
    %15 = vector.broadcast %cst_13 : f32 to vector<1x64xf32>
    %16 = arith.cmpf ogt, %14, %15 : vector<1x64xf32>
    %cst_14 = arith.constant 0.000000e+00 : f32
    %17 = vector.broadcast %cst_14 : f32 to vector<1x64xf32>
    %18 = arith.minimumf %14, %17 : vector<1x64xf32>
    %19 = math.exp %18 : vector<1x64xf32>
    %cst_15 = arith.constant 1.000000e+00 : f32
    %20 = vector.broadcast %cst_15 : f32 to vector<1x64xf32>
    %21 = arith.subf %19, %20 : vector<1x64xf32>
    %22 = arith.select %16, %14, %21 : vector<1x64xi1>, vector<1x64xf32>
    %cst_16 = arith.constant 3.000000e-01 : f32
    %23 = vector.broadcast %cst_16 : f32 to vector<1x64xf32>
    %24 = arith.mulf %23, %10 : vector<1x64xf32>
    %cst_17 = arith.constant 0.699999988 : f32
    %25 = vector.broadcast %cst_17 : f32 to vector<1x64xf32>
    %26 = arith.mulf %25, %22 : vector<1x64xf32>
    %27 = arith.addf %24, %26 : vector<1x64xf32>
    %c0_18 = arith.constant 0 : index
    %c0_19 = arith.constant 0 : index
    %c0_20 = arith.constant 0 : index
    %28 = vector.load %arg6[%c0_18, %c0_19, %c0_20] : memref<1x1x64xf32, #tpu.memory_space<vmem>>, vector<1x1x64xf32>
    %29 = vector.shape_cast %28 : vector<1x1x64xf32> to vector<1x64xf32>
    %30 = vector.shape_cast %27 : vector<1x64xf32> to vector<1x1x64xf32>
    tpu.vector_store %arg6[%c0_18, %c0_19, %c0_20], %30 {strides = array<i32>} : memref<1x1x64xf32, #tpu.memory_space<vmem>>, vector<1x1x64xf32>,
    return
  }
  func.func @transform_0(%arg0: i32) -> (i32, i32, i32) {
    %c0_i32 = arith.constant 0 : i32
    %c0_i32_0 = arith.constant 0 : i32
    %c0_i32_1 = arith.constant 0 : i32
    return %arg0, %c0_i32, %c0_i32_0 : i32, i32, i32
  }
  func.func @transform_1(%arg0: i32) -> (i32, i32) {
    %c0_i32 = arith.constant 0 : i32
    %c0_i32_0 = arith.constant 0 : i32
    %c0_i32_1 = arith.constant 0 : i32
    return %c0_i32, %c0_i32_0 : i32, i32
  }
  func.func @transform_2(%arg0: i32) -> (i32, i32) {
    %c0_i32 = arith.constant 0 : i32
    %c0_i32_0 = arith.constant 0 : i32
    %c0_i32_1 = arith.constant 0 : i32
    return %c0_i32, %c0_i32_0 : i32, i32
  }
  func.func @transform_3(%arg0: i32) -> (i32, i32) {
    %c0_i32 = arith.constant 0 : i32
    %c0_i32_0 = arith.constant 0 : i32
    %c0_i32_1 = arith.constant 0 : i32
    return %c0_i32, %c0_i32_0 : i32, i32
  }
  func.func @transform_4(%arg0: i32) -> (i32, i32) {
    %c0_i32 = arith.constant 0 : i32
    %c0_i32_0 = arith.constant 0 : i32
    %c0_i32_1 = arith.constant 0 : i32
    return %c0_i32, %c0_i32_0 : i32, i32
  }
  func.func @transform_5(%arg0: i32) -> (i32, i32, i32) {
    %c0_i32 = arith.constant 0 : i32
    %c0_i32_0 = arith.constant 0 : i32
    %c0_i32_1 = arith.constant 0 : i32
    return %arg0, %c0_i32, %c0_i32_0 : i32, i32, i32
  }
}

</mosaic_0001>

<llo_original>
// kernel: tpu_custom_call.1
$region0: #{tpu_custom_call.1}
  #allocation0 [shape = 'u32[]', space=smem, size = 0x4, offset = 0x4, fixed_abs, tag = 'smem constant byte address 0x4 - core index']
  #allocation1 [shape = 'u32[144,128]{1,0:T(1,128)}', space=vmem, size = 0x12000, scoped, tag = 'internal scratch']
  %s0 = inlined_call_operand.hbm [shape: f32[2,40,256], index: 0, kind: input, shape index: {}]
  %s1 = inlined_call_operand.vmem [shape: f32[64,40], index: 1, kind: input, shape index: {}]
  %s2 = inlined_call_operand.vmem [shape: f32[1,64], index: 2, kind: input, shape index: {}]
  %s3 = inlined_call_operand.vmem [shape: f32[64,64], index: 3, kind: input, shape index: {}]
  %s4 = inlined_call_operand.vmem [shape: f32[1,64], index: 4, kind: input, shape index: {}]
  %s5 = inlined_call_operand.hbm [shape: f32[2,1,64], index: 5, kind: output, shape index: {}]
  %s6 = sld [smem:[#allocation0]]
  $region57: #{tpu_custom_call.1} parent=0
    _
  %s8 = ssub.s32 1, %s6
  %s9 = scalar_select 0, %s8, %s6
  $region1: #{tpu_custom_call.1} parent=0
    #allocation2 [shape = 'u8[81920]{0}', space=vmem, size = 0x14000, scoped, tag = 'input window, operand 0']
    #allocation3 [shape = 's32[2]{0}', space=sflag, size = 0x8, scoped, tag = 'scoped memory for tpu_custom_call.1']
    #allocation4 [shape = 's32[2]{0}', space=sflag, size = 0x8, scoped, tag = 'scoped memory for tpu_custom_call.1']
    #allocation5 [shape = 'u8[1024]{0}', space=vmem, size = 0x400, scoped, tag = 'output window, operand 0']
    %10 = vsyncpa [#allocation3], 0
    %s11 = scalar_lea.sflag [#allocation3], 1
    %12 = vsyncpa %s11, 0
    %13 = vsyncpa [#allocation4], 0
    %s14 = scalar_lea.sflag [#allocation4], 1
    %15 = vsyncpa %s14, 0
    loop: start=0, step=1, limit=4
    $region2: #{tpu_custom_call.1} parent=1 // loop_pre_header
      _
    $region3: #{tpu_custom_call.1} parent=1 // loop_header
      %s17 = sphi 0, %s21
      %p18 = scmp.ge.s32.totalorder %s17, 4
      %s27 = sphi 0, %s29
      %s30 = sphi 0, %s27
      %s31 = sphi 0, %s30
      %s47 = sphi 0, %s31
      %s51 = sphi 0, %s51
      %s53 = sphi 0, %s51
      %s54 = sphi 0, %s53
      %s68 = sphi 0, %s54
      %s72 = sphi 0, %s72
      %s74 = sphi 0, %s72
      %s75 = sphi 0, %s74
      %s89 = sphi 0, %s75
      %s93 = sphi 0, %s93
      %s95 = sphi 0, %s93
      %s96 = sphi 0, %s95
      %s110 = sphi 0, %s96
      %s114 = sphi 0, %s114
      %s116 = sphi 0, %s114
      %s117 = sphi 0, %s116
      %s131 = sphi 0, %s117
      %s137 = sphi 0, %s139
      %s140 = sphi 0, %s137
      %s141 = sphi 0, %s140
      %s157 = sphi 0, %s141
    $region4: #{tpu_custom_call.1} parent=1 // loop_header_branch
      %20 = sbr.rel (%p18) target = $region8
    $region5: #{tpu_custom_call.1} parent=1 // loop_body
      %s22 = ssub.s32 %s17, 1
      %s23 = ssub.s32 %s17, 2
      %s24 = sadd.s32 %s17, 1
      %s25 = ssub.s32 %s17, %s24
      %p26 = scmp.eq.s32.totalorder %s25, 0
      %s28 = sadd.s32 %s27, 1
      %s29 = scalar_select %p26, %s27, %s28
      %p32 = pneg %p26
      %p33 = scmp.eq.s32.totalorder %s17, 1
      %p34 = por %p32, %p33
      %p35 = scmp.ne.s32.totalorder %s27, %s30
      %p36 = scmp.eq.s32.totalorder %s17, 0
      %p37 = por %p35, %p36
      %p38 = scmp.ne.s32.totalorder %s27, %s30
      %p39 = scmp.eq.s32.totalorder %s22, 1
      %p40 = por %p38, %p39
      %p41 = scmp.ne.s32.totalorder %s30, %s31
      %p42 = scmp.eq.s32.totalorder %s22, 0
      %p43 = por %p41, %p42
      %p44 = scmp.ne.s32.totalorder %s30, %s31
      %p45 = scmp.eq.s32.totalorder %s23, 1
      %p46 = por %p44, %p45
      %p48 = scmp.ne.s32.totalorder %s31, %s47
      %p49 = scmp.eq.s32.totalorder %s23, 0
      %p50 = por %p48, %p49
      %s52 = sadd.s32 %s51, 1
      %p55 = scmp.eq.s32.totalorder %s17, 1
      %p56 = scmp.ne.s32.totalorder %s51, %s53
      %p57 = scmp.eq.s32.totalorder %s17, 0
      %p58 = por %p56, %p57
      %p59 = scmp.ne.s32.totalorder %s51, %s53
      %p60 = scmp.eq.s32.totalorder %s22, 1
      %p61 = por %p59, %p60
      %p62 = scmp.ne.s32.totalorder %s53, %s54
      %p63 = scmp.eq.s32.totalorder %s22, 0
      %p64 = por %p62, %p63
      %p65 = scmp.ne.s32.totalorder %s53, %s54
      %p66 = scmp.eq.s32.totalorder %s23, 1
      %p67 = por %p65, %p66
      %p69 = scmp.ne.s32.totalorder %s54, %s68
      %p70 = scmp.eq.s32.totalorder %s23, 0
      %p71 = por %p69, %p70
      %s73 = sadd.s32 %s72, 1
      %p76 = scmp.eq.s32.totalorder %s17, 1
      %p77 = scmp.ne.s32.totalorder %s72, %s74
      %p78 = scmp.eq.s32.totalorder %s17, 0
      %p79 = por %p77, %p78
      %p80 = scmp.ne.s32.totalorder %s72, %s74
      %p81 = scmp.eq.s32.totalorder %s22, 1
      %p82 = por %p80, %p81
      %p83 = scmp.ne.s32.totalorder %s74, %s75
      %p84 = scmp.eq.s32.totalorder %s22, 0
      %p85 = por %p83, %p84
      %p86 = scmp.ne.s32.totalorder %s74, %s75
      %p87 = scmp.eq.s32.totalorder %s23, 1
      %p88 = por %p86, %p87
      %p90 = scmp.ne.s32.totalorder %s75, %s89
      %p91 = scmp.eq.s32.totalorder %s23, 0
      %p92 = por %p90, %p91
      %s94 = sadd.s32 %s93, 1
      %p97 = scmp.eq.s32.totalorder %s17, 1
      %p98 = scmp.ne.s32.totalorder %s93, %s95
      %p99 = scmp.eq.s32.totalorder %s17, 0
      %p100 = por %p98, %p99
      %p101 = scmp.ne.s32.totalorder %s93, %s95
      %p102 = scmp.eq.s32.totalorder %s22, 1
      %p103 = por %p101, %p102
      %p104 = scmp.ne.s32.totalorder %s95, %s96
      %p105 = scmp.eq.s32.totalorder %s22, 0
      %p106 = por %p104, %p105
      %p107 = scmp.ne.s32.totalorder %s95, %s96
      %p108 = scmp.eq.s32.totalorder %s23, 1
      %p109 = por %p107, %p108
      %p111 = scmp.ne.s32.totalorder %s96, %s110
      %p112 = scmp.eq.s32.totalorder %s23, 0
      %p113 = por %p111, %p112
      %s115 = sadd.s32 %s114, 1
      %p118 = scmp.eq.s32.totalorder %s17, 1
      %p119 = scmp.ne.s32.totalorder %s114, %s116
      %p120 = scmp.eq.s32.totalorder %s17, 0
      %p121 = por %p119, %p120
      %p122 = scmp.ne.s32.totalorder %s114, %s116
      %p123 = scmp.eq.s32.totalorder %s22, 1
      %p124 = por %p122, %p123
      %p125 = scmp.ne.s32.totalorder %s116, %s117
      %p126 = scmp.eq.s32.totalorder %s22, 0
      %p127 = por %p125, %p126
      %p128 = scmp.ne.s32.totalorder %s116, %s117
      %p129 = scmp.eq.s32.totalorder %s23, 1
      %p130 = por %p128, %p129
      %p132 = scmp.ne.s32.totalorder %s117, %s131
      %p133 = scmp.eq.s32.totalorder %s23, 0
      %p134 = por %p132, %p133
      %s135 = ssub.s32 %s17, %s24
      %p136 = scmp.eq.s32.totalorder %s135, 0
      %s138 = sadd.s32 %s137, 1
      %s139 = scalar_select %p136, %s137, %s138
      %p142 = pneg %p136
      %p143 = scmp.eq.s32.totalorder %s17, 1
      %p144 = por %p142, %p143
      %p145 = scmp.ne.s32.totalorder %s137, %s140
      %p146 = scmp.eq.s32.totalorder %s17, 0
      %p147 = por %p145, %p146
      %p148 = scmp.ne.s32.totalorder %s137, %s140
      %p149 = scmp.eq.s32.totalorder %s22, 1
      %p150 = por %p148, %p149
      %p151 = scmp.ne.s32.totalorder %s140, %s141
      %p152 = scmp.eq.s32.totalorder %s22, 0
      %p153 = por %p151, %p152
      %p154 = scmp.ne.s32.totalorder %s140, %s141
      %p155 = scmp.eq.s32.totalorder %s23, 1
      %p156 = por %p154, %p155
      %p158 = scmp.ne.s32.totalorder %s141, %s157
      %p159 = scmp.eq.s32.totalorder %s23, 0
      %p160 = por %p158, %p159
      %p161 = scmp.le.s32.totalorder 1, %s17
      %p162 = scmp.lt.s32.totalorder %s17, 3
      %p163 = pnand %p161, %p162
      %p164 = pneg %p163
      // Predicated region
      $region9: #{tpu_custom_call.1} parent=5 // pred_check
        _
      $region10: #{tpu_custom_call.1} parent=5 // pred_check_branch
        %166 = sbr.rel (%p163) target = $region12
      $region11: #{tpu_custom_call.1} parent=5 // pred_region
        %s167 = ssub.s32 %s17, 1
        // Predicated region
        $region13: #{tpu_custom_call.1} parent=11 // pred_check
          %p168 = pneg %p64
        $region14: #{tpu_custom_call.1} parent=11 // pred_check_branch
          %170 = sbr.rel (%p168) target = $region16
        $region15: #{tpu_custom_call.1} parent=11 // pred_region
          _
        $region16: #{tpu_custom_call.1} parent=11 // pred_fallthru
          _
        // Predicated region
        $region17: #{tpu_custom_call.1} parent=11 // pred_check
          %p171 = pneg %p85
        $region18: #{tpu_custom_call.1} parent=11 // pred_check_branch
          %173 = sbr.rel (%p171) target = $region20
        $region19: #{tpu_custom_call.1} parent=11 // pred_region
          _
        $region20: #{tpu_custom_call.1} parent=11 // pred_fallthru
          _
        // Predicated region
        $region21: #{tpu_custom_call.1} parent=11 // pred_check
          %p174 = pneg %p106
        $region22: #{tpu_custom_call.1} parent=11 // pred_check_branch
          %176 = sbr.rel (%p174) target = $region24
        $region23: #{tpu_custom_call.1} parent=11 // pred_region
          _
        $region24: #{tpu_custom_call.1} parent=11 // pred_fallthru
          _
        // Predicated region
        $region25: #{tpu_custom_call.1} parent=11 // pred_check
          %p177 = pneg %p127
        $region26: #{tpu_custom_call.1} parent=11 // pred_check_branch
          %179 = sbr.rel (%p177) target = $region28
        $region27: #{tpu_custom_call.1} parent=11 // pred_region
          _
        $region28: #{tpu_custom_call.1} parent=11 // pred_fallthru
          _
      $region12: #{tpu_custom_call.1} parent=5 // pred_fallthru
        _
      %p180 = scmp.lt.s32.totalorder %s17, 2
      // Predicated region
      $region29: #{tpu_custom_call.1} parent=5 // pred_check
        %p181 = pneg %p180
      $region30: #{tpu_custom_call.1} parent=5 // pred_check_branch
        %183 = sbr.rel (%p181) target = $region32
      $region31: #{tpu_custom_call.1} parent=5 // pred_region
        // Predicated region
        $region33: #{tpu_custom_call.1} parent=31 // pred_check
          %p184 = pneg %p37
        $region34: #{tpu_custom_call.1} parent=31 // pred_check_branch
          %186 = sbr.rel (%p184) target = $region36
        $region35: #{tpu_custom_call.1} parent=31 // pred_region
          %s187 = sand.u32 %s27, 1
          %s188 = scalar_lea.sflag [#allocation3], %s187
          %s189 = sand.u32 %s27, 1
          %s190 = smul.addr %s189, 80
          %s191 = scalar_lea.vmem [#allocation2], %s190
          %s193 = ssub.s32 1280, 1280
          %194 = vsyncadd %s188, %s193
          %s195 = smul.addr %s17, 10
          %s196 = smul.addr %s195, 128
          %s197 = scalar_lea.hbm %s0, %s196
          %s198 = sshll.u32 %s191, 4
          %s199 = int_to_ptr.vmem [resolvable:$true] %s198
          %204 = dma.hbm_to_vmem [thread:$0]  %s197, 1280, %s199, %s188, 256, 256, 16
        $region36: #{tpu_custom_call.1} parent=31 // pred_fallthru
          _
      $region32: #{tpu_custom_call.1} parent=5 // pred_fallthru
        _
      %p205 = scmp.le.s32.totalorder 1, %s17
      %p206 = scmp.lt.s32.totalorder %s17, 3
      %p207 = pnand %p205, %p206
      %p208 = pneg %p207
      // Predicated region
      $region37: #{tpu_custom_call.1} parent=5 // pred_check
        _
      $region38: #{tpu_custom_call.1} parent=5 // pred_check_branch
        %210 = sbr.rel (%p207) target = $region40
      $region39: #{tpu_custom_call.1} parent=5 // pred_region
        %s211 = ssub.s32 %s17, 1
        %s212 = sand.u32 %s30, 1
        %s213 = scalar_lea.sflag [#allocation3], %s212
        %s214 = sand.u32 %s30, 1
        %s215 = smul.addr %s214, 80
        %s216 = scalar_lea.vmem [#allocation2], %s215
        // Predicated region
        $region41: #{tpu_custom_call.1} parent=39 // pred_check
          %p217 = pneg %p43
        $region42: #{tpu_custom_call.1} parent=39 // pred_check_branch
          %219 = sbr.rel (%p217) target = $region44
        $region43: #{tpu_custom_call.1} parent=39 // pred_region
          %220 = dma.done %s213, 1280
        $region44: #{tpu_custom_call.1} parent=39 // pred_fallthru
          _
        %s221 = sand.u32 %s30, 1
        %s222 = scalar_lea.sflag [#allocation3], %s221
        %s223 = sand.u32 %s30, 1
        %s224 = smul.addr %s223, 80
        %s225 = scalar_lea.vmem [#allocation2], %s224
        %p226 = pneg %p43
        %p227 = pneg %p40
        %p228 = pneg %p64
        %p229 = pneg %p61
        %p230 = pneg %p85
        %p231 = pneg %p82
        %p232 = pneg %p106
        %p233 = pneg %p103
        %p234 = pneg %p127
        %p235 = pneg %p124
        %p236 = pneg %p153
        %p237 = pneg %p150
        %s238 = sand.u32 %s140, 1
        %s239 = scalar_lea.sflag [#allocation4], %s238
        %s240 = sand.u32 %s140, 1
        %s241 = scalar_lea.vmem [#allocation5], %s240
        %v242 = vld [vmem:[%s1] sm:$0xff]
        %v243 = vld [vmem:[%s1 + $0x8] sm:$0xff]
        %v244 = vld [vmem:[%s1 + $0x10] sm:$0xff]
        %v245 = vld [vmem:[%s1 + $0x18] sm:$0xff]
        %v246 = vld [vmem:[%s1 + $0x20] sm:$0xff]
        %v247 = vld [vmem:[%s1 + $0x28] sm:$0xff]
        %v248 = vld [vmem:[%s1 + $0x30] sm:$0xff]
        %v249 = vld [vmem:[%s1 + $0x38] sm:$0xff]
        %v250 = vld [vmem:[%s216] sm:$0xff]
        %v251 = vld [vmem:[%s216 + $0x8] sm:$0xff]
        %v252 = vld [vmem:[%s216 + $0x10] sm:$0xff]
        %v253 = vld [vmem:[%s216 + $0x18] sm:$0xff]
        %v254 = vld [vmem:[%s216 + $0x20] sm:$0xff]
        %v255 = vld [vmem:[%s216 + $0x28] sm:$0xff]
        %v256 = vld [vmem:[%s216 + $0x30] sm:$0xff]
        %v257 = vld [vmem:[%s216 + $0x38] sm:$0xff]
        %v258 = vld [vmem:[%s216 + $0x40] sm:$0xff]
        %v259 = vld [vmem:[%s216 + $0x48] sm:$0xff]
        %vm260 = vcmask 326656
        %v262 = vsel %vm260, %v242, 0
        %v265 = vsel %vm260, %v243, 0
        %v268 = vsel %vm260, %v244, 0
        %v271 = vsel %vm260, %v245, 0
        %v274 = vsel %vm260, %v246, 0
        %v277 = vsel %vm260, %v247, 0
        %v280 = vsel %vm260, %v248, 0
        %v283 = vsel %vm260, %v249, 0
        %285 = vmatprep.subr.mxu0 %v251
        %286 = vmatpush1.msra.mxu0 %v250
        %287 = vmatprep.subr.mxu0 %v253
        %288 = vmatpush1.msra.mxu0 %v252
        %289 = vmatprep.subr.mxu0 %v255
        %290 = vmatpush1.msra.mxu0 %v254
        %291 = vmatprep.subr.mxu0 %v257
        %292 = vmatpush1.msra.mxu0 %v256
        %293 = vmatprep.subr.mxu0 %v259
        %294 = vmatpush1.msra.mxu0 %v258
        %295 = vmatprep.subr.mxu0 0.0
        %296 = vmatpush1.msra.mxu0 0.0
        %297 = vmatprep.subr.mxu0 0.0
        %298 = vmatpush1.msra.mxu0 0.0
        %299 = vmatprep.subr.mxu0 0.0
        %300 = vmatpush1.msra.mxu0 0.0
        %301 = vmatprep.subr.mxu0 0.0
        %302 = vmatpush1.msra.mxu0 0.0
        %303 = vmatprep.subr.mxu0 0.0
        %304 = vmatpush1.msra.mxu0 0.0
        %305 = vmatprep.subr.mxu0 0.0
        %306 = vmatpush1.msra.mxu0 0.0
        %307 = vmatprep.subr.mxu0 0.0
        %308 = vmatpush1.msra.mxu0 0.0
        %309 = vmatprep.subr.mxu0 0.0
        %310 = vmatpush1.msra.mxu0 0.0
        %311 = vmatprep.subr.mxu0 0.0
        %312 = vmatpush1.msra.mxu0 0.0
        %313 = vmatprep.subr.mxu0 0.0
        %314 = vmatpush1.msra.mxu0 0.0
        %315 = vmatprep.subr.mxu0 0.0
        %316 = vmatpush1.msra.mxu0 0.0
        %317 = vmatprep.subr.mxu0 0.0
        %318 = vmatpush1.msra.mxu0 0.0
        %319 = vmatprep.subr.mxu0 0.0
        %320 = vmatpush1.msra.mxu0 0.0
        %321 = vmatprep.subr.mxu0 0.0
        %322 = vmatpush1.msra.mxu0 0.0
        %323 = vmatprep.subr.mxu0 0.0
        %324 = vmatpush1.msra.mxu0 0.0
        %325 = vmatprep.subr.mxu0 0.0
        %326 = vmatpush1.msra.mxu0 0.0
        %327 = vmatprep.subr.mxu0 0.0
        %328 = vmatpush1.msra.mxu0 0.0
        %329 = vmatprep.subr.mxu0 0.0
        %330 = vmatpush1.msra.mxu0 0.0
        %331 = vmatprep.subr.mxu0 0.0
        %332 = vmatpush1.msra.mxu0 0.0
        %333 = vmatprep.subr.mxu0 0.0
        %334 = vmatpush1.msra.mxu0 0.0
        %335 = vmatprep.subr.mxu0 0.0
        %336 = vmatpush1.msra.mxu0 0.0
        %337 = vmatprep.subr.mxu0 0.0
        %338 = vmatpush1.msra.mxu0 0.0
        %339 = vmatprep.subr.mxu0 0.0
        %340 = vmatpush1.msra.mxu0 0.0
        %341 = vmatprep.subr.mxu0 0.0
        %342 = vmatpush1.msra.mxu0 0.0
        %343 = vmatprep.subr.mxu0 0.0
        %344 = vmatpush1.msra.mxu0 0.0
        %345 = vmatprep.subr.mxu0 0.0
        %346 = vmatpush1.msra.mxu0 0.0
        %347 = vmatprep.subr.mxu0 0.0
        %348 = vmatpush1.msra.mxu0 0.0
        %349 = vmatprep.mubr.f32.mxu0 0.0
        %350 = vmatmul.mubr.f32.gmra.mrb[0].mxu0 %v262
        %v351 = vpop.f32.mrb[0].mxu0
        %v352 = vadd.f32 0.0, %v351
        %v353 = vpop.f32.mrb[0].mxu0
        %v354 = vadd.f32 0.0, %v353
        %355 = vmatprep.mubr.f32.mxu0 0.0
        %356 = vmatmul.mubr.f32.gmra.mrb[0].mxu0 %v265
        %v357 = vpop.f32.mrb[0].mxu0
        %v358 = vadd.f32 0.0, %v357
        %v359 = vpop.f32.mrb[0].mxu0
        %v360 = vadd.f32 0.0, %v359
        %361 = vmatprep.mubr.f32.mxu0 0.0
        %362 = vmatmul.mubr.f32.gmra.mrb[0].mxu0 %v268
        %v363 = vpop.f32.mrb[0].mxu0
        %v364 = vadd.f32 0.0, %v363
        %v365 = vpop.f32.mrb[0].mxu0
        %v366 = vadd.f32 0.0, %v365
        %367 = vmatprep.mubr.f32.mxu0 0.0
        %368 = vmatmul.mubr.f32.gmra.mrb[0].mxu0 %v271
        %v369 = vpop.f32.mrb[0].mxu0
        %v370 = vadd.f32 0.0, %v369
        %v371 = vpop.f32.mrb[0].mxu0
        %v372 = vadd.f32 0.0, %v371
        %373 = vmatprep.mubr.f32.mxu0 0.0
        %374 = vmatmul.mubr.f32.gmra.mrb[0].mxu0 %v274
        %v375 = vpop.f32.mrb[0].mxu0
        %v376 = vadd.f32 0.0, %v375
        %v377 = vpop.f32.mrb[0].mxu0
        %v378 = vadd.f32 0.0, %v377
        %379 = vmatprep.mubr.f32.mxu0 0.0
        %380 = vmatmul.mubr.f32.gmra.mrb[0].mxu0 %v277
        %v381 = vpop.f32.mrb[0].mxu0
        %v382 = vadd.f32 0.0, %v381
        %v383 = vpop.f32.mrb[0].mxu0
        %v384 = vadd.f32 0.0, %v383
        %385 = vmatprep.mubr.f32.mxu0 0.0
        %386 = vmatmul.mubr.f32.gmra.mrb[0].mxu0 %v280
        %v387 = vpop.f32.mrb[0].mxu0
        %v388 = vadd.f32 0.0, %v387
        %v389 = vpop.f32.mrb[0].mxu0
        %v390 = vadd.f32 0.0, %v389
        %391 = vmatprep.mubr.f32.mxu0 0.0
        %392 = vmatmul.mubr.f32.gmra.mrb[0].mxu0 %v283
        %v393 = vpop.f32.mrb[0].mxu0
        %v394 = vadd.f32 0.0, %v393
        %v395 = vpop.f32.mrb[0].mxu0
        %v396 = vadd.f32 0.0, %v395
        %397 = vdwg.mxu0
        %v414 = vcombine.low %v352, %v354
        %v415 = vcombine.high %v352, %v354
        %v417 = vunpack.c.l.s4 1966171168
        %v418 = vunpack.c.0.s8 %v417
        %v419 = vlaneseq
        %v420 = vshrl.u32 %v419, 7
        %v421 = vsub.s32 %v418, %v420
        %v422 = vrot.slane %v414, %v421
        %v424 = vunpack.c.l.s4 1966171168
        %v425 = vunpack.c.0.s8 %v424
        %v426 = vlaneseq
        %v427 = vshrl.u32 %v426, 7
        %v428 = vsub.s32 %v425, %v427
        %v429 = vrot.slane %v415, %v428
        %v430 = vcombine.high %v422, %v422
        %v431 = vcombine.high %v429, %v429
        %v433 = vunpack.c.l.s4 1966171168
        %v434 = vunpack.c.0.s8 %v433
        %v435 = vlaneseq
        %v436 = vshrl.u32 %v435, 7
        %v437 = vsub.s32 %v434, %v436
        %v438 = vrot.slane %v422, %v437
        %v440 = vunpack.c.l.s4 1966171168
        %v441 = vunpack.c.0.s8 %v440
        %v442 = vlaneseq
        %v443 = vshrl.u32 %v442, 7
        %v444 = vsub.s32 %v441, %v443
        %v445 = vrot.slane %v429, %v444
        %v447 = vunpack.c.l.s4 1966171168
        %v448 = vunpack.c.0.s8 %v447
        %v449 = vlaneseq
        %v450 = vshrl.u32 %v449, 7
        %v451 = vsub.s32 %v448, %v450
        %v452 = vrot.slane %v430, %v451
        %v454 = vunpack.c.l.s4 1966171168
        %v455 = vunpack.c.0.s8 %v454
        %v456 = vlaneseq
        %v457 = vshrl.u32 %v456, 7
        %v458 = vsub.s32 %v455, %v457
        %v459 = vrot.slane %v431, %v458
        %v460 = vcombine.high %v438, %v438
        %v461 = vcombine.high %v445, %v445
        %v462 = vcombine.high %v452, %v452
        %v463 = vcombine.high %v459, %v459
        %v464 = vcombine.low %v358, %v360
        %v465 = vcombine.high %v358, %v360
        %v467 = vunpack.c.l.s4 1966171168
        %v468 = vunpack.c.0.s8 %v467
        %v469 = vlaneseq
        %v470 = vshrl.u32 %v469, 7
        %v471 = vsub.s32 %v468, %v470
        %v472 = vrot.slane %v464, %v471
        %v474 = vunpack.c.l.s4 1966171168
        %v475 = vunpack.c.0.s8 %v474
        %v476 = vlaneseq
        %v477 = vshrl.u32 %v476, 7
        %v478 = vsub.s32 %v475, %v477
        %v479 = vrot.slane %v465, %v478
        %v480 = vcombine.high %v472, %v472
        %v481 = vcombine.high %v479, %v479
        %v483 = vunpack.c.l.s4 1966171168
        %v484 = vunpack.c.0.s8 %v483
        %v485 = vlaneseq
        %v486 = vshrl.u32 %v485, 7
        %v487 = vsub.s32 %v484, %v486
        %v488 = vrot.slane %v472, %v487
        %v490 = vunpack.c.l.s4 1966171168
        %v491 = vunpack.c.0.s8 %v490
        %v492 = vlaneseq
        %v493 = vshrl.u32 %v492, 7
        %v494 = vsub.s32 %v491, %v493
        %v495 = vrot.slane %v479, %v494
        %v497 = vunpack.c.l.s4 1966171168
        %v498 = vunpack.c.0.s8 %v497
        %v499 = vlaneseq
        %v500 = vshrl.u32 %v499, 7
        %v501 = vsub.s32 %v498, %v500
        %v502 = vrot.slane %v480, %v501
        %v504 = vunpack.c.l.s4 1966171168
        %v505 = vunpack.c.0.s8 %v504
        %v506 = vlaneseq
        %v507 = vshrl.u32 %v506, 7
        %v508 = vsub.s32 %v505, %v507
        %v509 = vrot.slane %v481, %v508
        %v510 = vcombine.high %v488, %v488
        %v511 = vcombine.high %v495, %v495
        %v512 = vcombine.high %v502, %v502
        %v513 = vcombine.high %v509, %v509
        %v514 = vcombine.low %v364, %v366
        %v515 = vcombine.high %v364, %v366
        %v517 = vunpack.c.l.s4 1966171168
        %v518 = vunpack.c.0.s8 %v517
        %v519 = vlaneseq
        %v520 = vshrl.u32 %v519, 7
        %v521 = vsub.s32 %v518, %v520
        %v522 = vrot.slane %v514, %v521
        %v524 = vunpack.c.l.s4 1966171168
        %v525 = vunpack.c.0.s8 %v524
        %v526 = vlaneseq
        %v527 = vshrl.u32 %v526, 7
        %v528 = vsub.s32 %v525, %v527
        %v529 = vrot.slane %v515, %v528
        %v530 = vcombine.high %v522, %v522
        %v531 = vcombine.high %v529, %v529
        %v533 = vunpack.c.l.s4 1966171168
        %v534 = vunpack.c.0.s8 %v533
        %v535 = vlaneseq
        %v536 = vshrl.u32 %v535, 7
        %v537 = vsub.s32 %v534, %v536
        %v538 = vrot.slane %v522, %v537
        %v540 = vunpack.c.l.s4 1966171168
        %v541 = vunpack.c.0.s8 %v540
        %v542 = vlaneseq
        %v543 = vshrl.u32 %v542, 7
        %v544 = vsub.s32 %v541, %v543
        %v545 = vrot.slane %v529, %v544
        %v547 = vunpack.c.l.s4 1966171168
        %v548 = vunpack.c.0.s8 %v547
        %v549 = vlaneseq
        %v550 = vshrl.u32 %v549, 7
        %v551 = vsub.s32 %v548, %v550
        %v552 = vrot.slane %v530, %v551
        %v554 = vunpack.c.l.s4 1966171168
        %v555 = vunpack.c.0.s8 %v554
        %v556 = vlaneseq
        %v557 = vshrl.u32 %v556, 7
        %v558 = vsub.s32 %v555, %v557
        %v559 = vrot.slane %v531, %v558
        %v560 = vcombine.high %v538, %v538
        %v561 = vcombine.high %v545, %v545
        %v562 = vcombine.high %v552, %v552
        %v563 = vcombine.high %v559, %v559
        %v564 = vcombine.low %v370, %v372
        %v565 = vcombine.high %v370, %v372
        %v567 = vunpack.c.l.s4 1966171168
        %v568 = vunpack.c.0.s8 %v567
        %v569 = vlaneseq
        %v570 = vshrl.u32 %v569, 7
        %v571 = vsub.s32 %v568, %v570
        %v572 = vrot.slane %v564, %v571
        %v574 = vunpack.c.l.s4 1966171168
        %v575 = vunpack.c.0.s8 %v574
        %v576 = vlaneseq
        %v577 = vshrl.u32 %v576, 7
        %v578 = vsub.s32 %v575, %v577
        %v579 = vrot.slane %v565, %v578
        %v580 = vcombine.high %v572, %v572
        %v581 = vcombine.high %v579, %v579
        %v583 = vunpack.c.l.s4 1966171168
        %v584 = vunpack.c.0.s8 %v583
        %v585 = vlaneseq
        %v586 = vshrl.u32 %v585, 7
        %v587 = vsub.s32 %v584, %v586
        %v588 = vrot.slane %v572, %v587
        %v590 = vunpack.c.l.s4 1966171168
        %v591 = vunpack.c.0.s8 %v590
        %v592 = vlaneseq
        %v593 = vshrl.u32 %v592, 7
        %v594 = vsub.s32 %v591, %v593
        %v595 = vrot.slane %v579, %v594
        %v597 = vunpack.c.l.s4 1966171168
        %v598 = vunpack.c.0.s8 %v597
        %v599 = vlaneseq
        %v600 = vshrl.u32 %v599, 7
        %v601 = vsub.s32 %v598, %v600
        %v602 = vrot.slane %v580, %v601
        %v604 = vunpack.c.l.s4 1966171168
        %v605 = vunpack.c.0.s8 %v604
        %v606 = vlaneseq
        %v607 = vshrl.u32 %v606, 7
        %v608 = vsub.s32 %v605, %v607
        %v609 = vrot.slane %v581, %v608
        %v610 = vcombine.high %v588, %v588
        %v611 = vcombine.high %v595, %v595
        %v612 = vcombine.high %v602, %v602
        %v613 = vcombine.high %v609, %v609
        %v614 = vcombine.low %v376, %v378
        %v615 = vcombine.high %v376, %v378
        %v617 = vunpack.c.l.s4 1966171168
        %v618 = vunpack.c.0.s8 %v617
        %v619 = vlaneseq
        %v620 = vshrl.u32 %v619, 7
        %v621 = vsub.s32 %v618, %v620
        %v622 = vrot.slane %v614, %v621
        %v624 = vunpack.c.l.s4 1966171168
        %v625 = vunpack.c.0.s8 %v624
        %v626 = vlaneseq
        %v627 = vshrl.u32 %v626, 7
        %v628 = vsub.s32 %v625, %v627
        %v629 = vrot.slane %v615, %v628
        %v630 = vcombine.high %v622, %v622
        %v631 = vcombine.high %v629, %v629
        %v633 = vunpack.c.l.s4 1966171168
        %v634 = vunpack.c.0.s8 %v633
        %v635 = vlaneseq
        %v636 = vshrl.u32 %v635, 7
        %v637 = vsub.s32 %v634, %v636
        %v638 = vrot.slane %v622, %v637
        %v640 = vunpack.c.l.s4 1966171168
        %v641 = vunpack.c.0.s8 %v640
        %v642 = vlaneseq
        %v643 = vshrl.u32 %v642, 7
        %v644 = vsub.s32 %v641, %v643
        %v645 = vrot.slane %v629, %v644
        %v647 = vunpack.c.l.s4 1966171168
        %v648 = vunpack.c.0.s8 %v647
        %v649 = vlaneseq
        %v650 = vshrl.u32 %v649, 7
        %v651 = vsub.s32 %v648, %v650
        %v652 = vrot.slane %v630, %v651
        %v654 = vunpack.c.l.s4 1966171168
        %v655 = vunpack.c.0.s8 %v654
        %v656 = vlaneseq
        %v657 = vshrl.u32 %v656, 7
        %v658 = vsub.s32 %v655, %v657
        %v659 = vrot.slane %v631, %v658
        %v660 = vcombine.high %v638, %v638
        %v661 = vcombine.high %v645, %v645
        %v662 = vcombine.high %v652, %v652
        %v663 = vcombine.high %v659, %v659
        %v664 = vcombine.low %v382, %v384
        %v665 = vcombine.high %v382, %v384
        %v667 = vunpack.c.l.s4 1966171168
        %v668 = vunpack.c.0.s8 %v667
        %v669 = vlaneseq
        %v670 = vshrl.u32 %v669, 7
        %v671 = vsub.s32 %v668, %v670
        %v672 = vrot.slane %v664, %v671
        %v674 = vunpack.c.l.s4 1966171168
        %v675 = vunpack.c.0.s8 %v674
        %v676 = vlaneseq
        %v677 = vshrl.u32 %v676, 7
        %v678 = vsub.s32 %v675, %v677
        %v679 = vrot.slane %v665, %v678
        %v680 = vcombine.high %v672, %v672
        %v681 = vcombine.high %v679, %v679
        %v683 = vunpack.c.l.s4 1966171168
        %v684 = vunpack.c.0.s8 %v683
        %v685 = vlaneseq
        %v686 = vshrl.u32 %v685, 7
        %v687 = vsub.s32 %v684, %v686
        %v688 = vrot.slane %v672, %v687
        %v690 = vunpack.c.l.s4 1966171168
        %v691 = vunpack.c.0.s8 %v690
        %v692 = vlaneseq
        %v693 = vshrl.u32 %v692, 7
        %v694 = vsub.s32 %v691, %v693
        %v695 = vrot.slane %v679, %v694
        %v697 = vunpack.c.l.s4 1966171168
        %v698 = vunpack.c.0.s8 %v697
        %v699 = vlaneseq
        %v700 = vshrl.u32 %v699, 7
        %v701 = vsub.s32 %v698, %v700
        %v702 = vrot.slane %v680, %v701
        %v704 = vunpack.c.l.s4 1966171168
        %v705 = vunpack.c.0.s8 %v704
        %v706 = vlaneseq
        %v707 = vshrl.u32 %v706, 7
        %v708 = vsub.s32 %v705, %v707
        %v709 = vrot.slane %v681, %v708
        %v710 = vcombine.high %v688, %v688
        %v711 = vcombine.high %v695, %v695
        %v712 = vcombine.high %v702, %v702
        %v713 = vcombine.high %v709, %v709
        %v714 = vcombine.low %v388, %v390
        %v715 = vcombine.high %v388, %v390
        %v717 = vunpack.c.l.s4 1966171168
        %v718 = vunpack.c.0.s8 %v717
        %v719 = vlaneseq
        %v720 = vshrl.u32 %v719, 7
        %v721 = vsub.s32 %v718, %v720
        %v722 = vrot.slane %v714, %v721
        %v724 = vunpack.c.l.s4 1966171168
        %v725 = vunpack.c.0.s8 %v724
        %v726 = vlaneseq
        %v727 = vshrl.u32 %v726, 7
        %v728 = vsub.s32 %v725, %v727
        %v729 = vrot.slane %v715, %v728
        %v730 = vcombine.high %v722, %v722
        %v731 = vcombine.high %v729, %v729
        %v733 = vunpack.c.l.s4 1966171168
        %v734 = vunpack.c.0.s8 %v733
        %v735 = vlaneseq
        %v736 = vshrl.u32 %v735, 7
        %v737 = vsub.s32 %v734, %v736
        %v738 = vrot.slane %v722, %v737
        %v740 = vunpack.c.l.s4 1966171168
        %v741 = vunpack.c.0.s8 %v740
        %v742 = vlaneseq
        %v743 = vshrl.u32 %v742, 7
        %v744 = vsub.s32 %v741, %v743
        %v745 = vrot.slane %v729, %v744
        %v747 = vunpack.c.l.s4 1966171168
        %v748 = vunpack.c.0.s8 %v747
        %v749 = vlaneseq
        %v750 = vshrl.u32 %v749, 7
        %v751 = vsub.s32 %v748, %v750
        %v752 = vrot.slane %v730, %v751
        %v754 = vunpack.c.l.s4 1966171168
        %v755 = vunpack.c.0.s8 %v754
        %v756 = vlaneseq
        %v757 = vshrl.u32 %v756, 7
        %v758 = vsub.s32 %v755, %v757
        %v759 = vrot.slane %v731, %v758
        %v760 = vcombine.high %v738, %v738
        %v761 = vcombine.high %v745, %v745
        %v762 = vcombine.high %v752, %v752
        %v763 = vcombine.high %v759, %v759
        %v764 = vcombine.low %v394, %v396
        %v765 = vcombine.high %v394, %v396
        %v767 = vunpack.c.l.s4 1966171168
        %v768 = vunpack.c.0.s8 %v767
        %v769 = vlaneseq
        %v770 = vshrl.u32 %v769, 7
        %v771 = vsub.s32 %v768, %v770
        %v772 = vrot.slane %v764, %v771
        %v774 = vunpack.c.l.s4 1966171168
        %v775 = vunpack.c.0.s8 %v774
        %v776 = vlaneseq
        %v777 = vshrl.u32 %v776, 7
        %v778 = vsub.s32 %v775, %v777
        %v779 = vrot.slane %v765, %v778
        %v780 = vcombine.high %v772, %v772
        %v781 = vcombine.high %v779, %v779
        %v783 = vunpack.c.l.s4 1966171168
        %v784 = vunpack.c.0.s8 %v783
        %v785 = vlaneseq
        %v786 = vshrl.u32 %v785, 7
        %v787 = vsub.s32 %v784, %v786
        %v788 = vrot.slane %v772, %v787
        %v790 = vunpack.c.l.s4 1966171168
        %v791 = vunpack.c.0.s8 %v790
        %v792 = vlaneseq
        %v793 = vshrl.u32 %v792, 7
        %v794 = vsub.s32 %v791, %v793
        %v795 = vrot.slane %v779, %v794
        %v797 = vunpack.c.l.s4 1966171168
        %v798 = vunpack.c.0.s8 %v797
        %v799 = vlaneseq
        %v800 = vshrl.u32 %v799, 7
        %v801 = vsub.s32 %v798, %v800
        %v802 = vrot.slane %v780, %v801
        %v804 = vunpack.c.l.s4 1966171168
        %v805 = vunpack.c.0.s8 %v804
        %v806 = vlaneseq
        %v807 = vshrl.u32 %v806, 7
        %v808 = vsub.s32 %v805, %v807
        %v809 = vrot.slane %v781, %v808
        %v810 = vcombine.high %v788, %v788
        %v811 = vcombine.high %v795, %v795
        %v812 = vcombine.high %v802, %v802
        %v813 = vcombine.high %v809, %v809
        %v814 = vlaneseq
        %v815 = vshrl.u32 %v814, 7
        %v816 = vsub.s32 0, %v815
        %v817 = vrot.slane %v438, %v816
        %v818 = vlaneseq
        %v819 = vshrl.u32 %v818, 7
        %v820 = vsub.s32 1, %v819
        %v821 = vrot.slane %v438, %v820
        %v822 = vlaneseq
        %v823 = vshrl.u32 %v822, 7
        %v824 = vsub.s32 0, %v823
        %v825 = vrot.slane %v452, %v824
        %v826 = vlaneseq
        %v827 = vshrl.u32 %v826, 7
        %v828 = vsub.s32 1, %v827
        %v829 = vrot.slane %v452, %v828
        %v830 = vlaneseq
        %v831 = vshrl.u32 %v830, 7
        %v832 = vsub.s32 0, %v831
        %v833 = vrot.slane %v460, %v832
        %v834 = vlaneseq
        %v835 = vshrl.u32 %v834, 7
        %v836 = vsub.s32 1, %v835
        %v837 = vrot.slane %v460, %v836
        %v838 = vlaneseq
        %v839 = vshrl.u32 %v838, 7
        %v840 = vsub.s32 0, %v839
        %v841 = vrot.slane %v462, %v840
        %v842 = vlaneseq
        %v843 = vshrl.u32 %v842, 7
        %v844 = vsub.s32 1, %v843
        %v845 = vrot.slane %v462, %v844
        %v846 = vlaneseq
        %v847 = vshrl.u32 %v846, 7
        %v848 = vsub.s32 0, %v847
        %v849 = vrot.slane %v445, %v848
        %v850 = vlaneseq
        %v851 = vshrl.u32 %v850, 7
        %v852 = vsub.s32 1, %v851
        %v853 = vrot.slane %v445, %v852
        %v854 = vlaneseq
        %v855 = vshrl.u32 %v854, 7
        %v856 = vsub.s32 0, %v855
        %v857 = vrot.slane %v459, %v856
        %v858 = vlaneseq
        %v859 = vshrl.u32 %v858, 7
        %v860 = vsub.s32 1, %v859
        %v861 = vrot.slane %v459, %v860
        %v862 = vlaneseq
        %v863 = vshrl.u32 %v862, 7
        %v864 = vsub.s32 0, %v863
        %v865 = vrot.slane %v461, %v864
        %v866 = vlaneseq
        %v867 = vshrl.u32 %v866, 7
        %v868 = vsub.s32 1, %v867
        %v869 = vrot.slane %v461, %v868
        %v870 = vlaneseq
        %v871 = vshrl.u32 %v870, 7
        %v872 = vsub.s32 0, %v871
        %v873 = vrot.slane %v463, %v872
        %v874 = vlaneseq
        %v875 = vshrl.u32 %v874, 7
        %v876 = vsub.s32 1, %v875
        %v877 = vrot.slane %v463, %v876
        %v878 = vlaneseq
        %v879 = vshrl.u32 %v878, 7
        %v880 = vsub.s32 0, %v879
        %v881 = vrot.slane %v488, %v880
        %v882 = vlaneseq
        %v883 = vshrl.u32 %v882, 7
        %v884 = vsub.s32 1, %v883
        %v885 = vrot.slane %v488, %v884
        %v886 = vlaneseq
        %v887 = vshrl.u32 %v886, 7
        %v888 = vsub.s32 0, %v887
        %v889 = vrot.slane %v502, %v888
        %v890 = vlaneseq
        %v891 = vshrl.u32 %v890, 7
        %v892 = vsub.s32 1, %v891
        %v893 = vrot.slane %v502, %v892
        %v894 = vlaneseq
        %v895 = vshrl.u32 %v894, 7
        %v896 = vsub.s32 0, %v895
        %v897 = vrot.slane %v510, %v896
        %v898 = vlaneseq
        %v899 = vshrl.u32 %v898, 7
        %v900 = vsub.s32 1, %v899
        %v901 = vrot.slane %v510, %v900
        %v902 = vlaneseq
        %v903 = vshrl.u32 %v902, 7
        %v904 = vsub.s32 0, %v903
        %v905 = vrot.slane %v512, %v904
        %v906 = vlaneseq
        %v907 = vshrl.u32 %v906, 7
        %v908 = vsub.s32 1, %v907
        %v909 = vrot.slane %v512, %v908
        %v910 = vlaneseq
        %v911 = vshrl.u32 %v910, 7
        %v912 = vsub.s32 0, %v911
        %v913 = vrot.slane %v495, %v912
        %v914 = vlaneseq
        %v915 = vshrl.u32 %v914, 7
        %v916 = vsub.s32 1, %v915
        %v917 = vrot.slane %v495, %v916
        %v918 = vlaneseq
        %v919 = vshrl.u32 %v918, 7
        %v920 = vsub.s32 0, %v919
        %v921 = vrot.slane %v509, %v920
        %v922 = vlaneseq
        %v923 = vshrl.u32 %v922, 7
        %v924 = vsub.s32 1, %v923
        %v925 = vrot.slane %v509, %v924
        %v926 = vlaneseq
        %v927 = vshrl.u32 %v926, 7
        %v928 = vsub.s32 0, %v927
        %v929 = vrot.slane %v511, %v928
        %v930 = vlaneseq
        %v931 = vshrl.u32 %v930, 7
        %v932 = vsub.s32 1, %v931
        %v933 = vrot.slane %v511, %v932
        %v934 = vlaneseq
        %v935 = vshrl.u32 %v934, 7
        %v936 = vsub.s32 0, %v935
        %v937 = vrot.slane %v513, %v936
        %v938 = vlaneseq
        %v939 = vshrl.u32 %v938, 7
        %v940 = vsub.s32 1, %v939
        %v941 = vrot.slane %v513, %v940
        %v942 = vlaneseq
        %v943 = vshrl.u32 %v942, 7
        %v944 = vsub.s32 0, %v943
        %v945 = vrot.slane %v538, %v944
        %v946 = vlaneseq
        %v947 = vshrl.u32 %v946, 7
        %v948 = vsub.s32 1, %v947
        %v949 = vrot.slane %v538, %v948
        %v950 = vlaneseq
        %v951 = vshrl.u32 %v950, 7
        %v952 = vsub.s32 0, %v951
        %v953 = vrot.slane %v552, %v952
        %v954 = vlaneseq
        %v955 = vshrl.u32 %v954, 7
        %v956 = vsub.s32 1, %v955
        %v957 = vrot.slane %v552, %v956
        %v958 = vlaneseq
        %v959 = vshrl.u32 %v958, 7
        %v960 = vsub.s32 0, %v959
        %v961 = vrot.slane %v560, %v960
        %v962 = vlaneseq
        %v963 = vshrl.u32 %v962, 7
        %v964 = vsub.s32 1, %v963
        %v965 = vrot.slane %v560, %v964
        %v966 = vlaneseq
        %v967 = vshrl.u32 %v966, 7
        %v968 = vsub.s32 0, %v967
        %v969 = vrot.slane %v562, %v968
        %v970 = vlaneseq
        %v971 = vshrl.u32 %v970, 7
        %v972 = vsub.s32 1, %v971
        %v973 = vrot.slane %v562, %v972
        %v974 = vlaneseq
        %v975 = vshrl.u32 %v974, 7
        %v976 = vsub.s32 0, %v975
        %v977 = vrot.slane %v545, %v976
        %v978 = vlaneseq
        %v979 = vshrl.u32 %v978, 7
        %v980 = vsub.s32 1, %v979
        %v981 = vrot.slane %v545, %v980
        %v982 = vlaneseq
        %v983 = vshrl.u32 %v982, 7
        %v984 = vsub.s32 0, %v983
        %v985 = vrot.slane %v559, %v984
        %v986 = vlaneseq
        %v987 = vshrl.u32 %v986, 7
        %v988 = vsub.s32 1, %v987
        %v989 = vrot.slane %v559, %v988
        %v990 = vlaneseq
        %v991 = vshrl.u32 %v990, 7
        %v992 = vsub.s32 0, %v991
        %v993 = vrot.slane %v561, %v992
        %v994 = vlaneseq
        %v995 = vshrl.u32 %v994, 7
        %v996 = vsub.s32 1, %v995
        %v997 = vrot.slane %v561, %v996
        %v998 = vlaneseq
        %v999 = vshrl.u32 %v998, 7
        %v1000 = vsub.s32 0, %v999
        %v1001 = vrot.slane %v563, %v1000
        %v1002 = vlaneseq
        %v1003 = vshrl.u32 %v1002, 7
        %v1004 = vsub.s32 1, %v1003
        %v1005 = vrot.slane %v563, %v1004
        %v1006 = vlaneseq
        %v1007 = vshrl.u32 %v1006, 7
        %v1008 = vsub.s32 0, %v1007
        %v1009 = vrot.slane %v588, %v1008
        %v1010 = vlaneseq
        %v1011 = vshrl.u32 %v1010, 7
        %v1012 = vsub.s32 1, %v1011
        %v1013 = vrot.slane %v588, %v1012
        %v1014 = vlaneseq
        %v1015 = vshrl.u32 %v1014, 7
        %v1016 = vsub.s32 0, %v1015
        %v1017 = vrot.slane %v602, %v1016
        %v1018 = vlaneseq
        %v1019 = vshrl.u32 %v1018, 7
        %v1020 = vsub.s32 1, %v1019
        %v1021 = vrot.slane %v602, %v1020
        %v1022 = vlaneseq
        %v1023 = vshrl.u32 %v1022, 7
        %v1024 = vsub.s32 0, %v1023
        %v1025 = vrot.slane %v610, %v1024
        %v1026 = vlaneseq
        %v1027 = vshrl.u32 %v1026, 7
        %v1028 = vsub.s32 1, %v1027
        %v1029 = vrot.slane %v610, %v1028
        %v1030 = vlaneseq
        %v1031 = vshrl.u32 %v1030, 7
        %v1032 = vsub.s32 0, %v1031
        %v1033 = vrot.slane %v612, %v1032
        %v1034 = vlaneseq
        %v1035 = vshrl.u32 %v1034, 7
        %v1036 = vsub.s32 1, %v1035
        %v1037 = vrot.slane %v612, %v1036
        %v1038 = vlaneseq
        %v1039 = vshrl.u32 %v1038, 7
        %v1040 = vsub.s32 0, %v1039
        %v1041 = vrot.slane %v595, %v1040
        %v1042 = vlaneseq
        %v1043 = vshrl.u32 %v1042, 7
        %v1044 = vsub.s32 1, %v1043
        %v1045 = vrot.slane %v595, %v1044
        %v1046 = vlaneseq
        %v1047 = vshrl.u32 %v1046, 7
        %v1048 = vsub.s32 0, %v1047
        %v1049 = vrot.slane %v609, %v1048
        %v1050 = vlaneseq
        %v1051 = vshrl.u32 %v1050, 7
        %v1052 = vsub.s32 1, %v1051
        %v1053 = vrot.slane %v609, %v1052
        %v1054 = vlaneseq
        %v1055 = vshrl.u32 %v1054, 7
        %v1056 = vsub.s32 0, %v1055
        %v1057 = vrot.slane %v611, %v1056
        %v1058 = vlaneseq
        %v1059 = vshrl.u32 %v1058, 7
        %v1060 = vsub.s32 1, %v1059
        %v1061 = vrot.slane %v611, %v1060
        %v1062 = vlaneseq
        %v1063 = vshrl.u32 %v1062, 7
        %v1064 = vsub.s32 0, %v1063
        %v1065 = vrot.slane %v613, %v1064
        %v1066 = vlaneseq
        %v1067 = vshrl.u32 %v1066, 7
        %v1068 = vsub.s32 1, %v1067
        %v1069 = vrot.slane %v613, %v1068
        %v1070 = vlaneseq
        %v1071 = vshrl.u32 %v1070, 7
        %v1072 = vsub.s32 0, %v1071
        %v1073 = vrot.slane %v638, %v1072
        %v1074 = vlaneseq
        %v1075 = vshrl.u32 %v1074, 7
        %v1076 = vsub.s32 1, %v1075
        %v1077 = vrot.slane %v638, %v1076
        %v1078 = vlaneseq
        %v1079 = vshrl.u32 %v1078, 7
        %v1080 = vsub.s32 0, %v1079
        %v1081 = vrot.slane %v652, %v1080
        %v1082 = vlaneseq
        %v1083 = vshrl.u32 %v1082, 7
        %v1084 = vsub.s32 1, %v1083
        %v1085 = vrot.slane %v652, %v1084
        %v1086 = vlaneseq
        %v1087 = vshrl.u32 %v1086, 7
        %v1088 = vsub.s32 0, %v1087
        %v1089 = vrot.slane %v660, %v1088
        %v1090 = vlaneseq
        %v1091 = vshrl.u32 %v1090, 7
        %v1092 = vsub.s32 1, %v1091
        %v1093 = vrot.slane %v660, %v1092
        %v1094 = vlaneseq
        %v1095 = vshrl.u32 %v1094, 7
        %v1096 = vsub.s32 0, %v1095
        %v1097 = vrot.slane %v662, %v1096
        %v1098 = vlaneseq
        %v1099 = vshrl.u32 %v1098, 7
        %v1100 = vsub.s32 1, %v1099
        %v1101 = vrot.slane %v662, %v1100
        %v1102 = vlaneseq
        %v1103 = vshrl.u32 %v1102, 7
        %v1104 = vsub.s32 0, %v1103
        %v1105 = vrot.slane %v645, %v1104
        %v1106 = vlaneseq
        %v1107 = vshrl.u32 %v1106, 7
        %v1108 = vsub.s32 1, %v1107
        %v1109 = vrot.slane %v645, %v1108
        %v1110 = vlaneseq
        %v1111 = vshrl.u32 %v1110, 7
        %v1112 = vsub.s32 0, %v1111
        %v1113 = vrot.slane %v659, %v1112
        %v1114 = vlaneseq
        %v1115 = vshrl.u32 %v1114, 7
        %v1116 = vsub.s32 1, %v1115
        %v1117 = vrot.slane %v659, %v1116
        %v1118 = vlaneseq
        %v1119 = vshrl.u32 %v1118, 7
        %v1120 = vsub.s32 0, %v1119
        %v1121 = vrot.slane %v661, %v1120
        %v1122 = vlaneseq
        %v1123 = vshrl.u32 %v1122, 7
        %v1124 = vsub.s32 1, %v1123
        %v1125 = vrot.slane %v661, %v1124
        %v1126 = vlaneseq
        %v1127 = vshrl.u32 %v1126, 7
        %v1128 = vsub.s32 0, %v1127
        %v1129 = vrot.slane %v663, %v1128
        %v1130 = vlaneseq
        %v1131 = vshrl.u32 %v1130, 7
        %v1132 = vsub.s32 1, %v1131
        %v1133 = vrot.slane %v663, %v1132
        %v1134 = vlaneseq
        %v1135 = vshrl.u32 %v1134, 7
        %v1136 = vsub.s32 0, %v1135
        %v1137 = vrot.slane %v688, %v1136
        %v1138 = vlaneseq
        %v1139 = vshrl.u32 %v1138, 7
        %v1140 = vsub.s32 1, %v1139
        %v1141 = vrot.slane %v688, %v1140
        %v1142 = vlaneseq
        %v1143 = vshrl.u32 %v1142, 7
        %v1144 = vsub.s32 0, %v1143
        %v1145 = vrot.slane %v702, %v1144
        %v1146 = vlaneseq
        %v1147 = vshrl.u32 %v1146, 7
        %v1148 = vsub.s32 1, %v1147
        %v1149 = vrot.slane %v702, %v1148
        %v1150 = vlaneseq
        %v1151 = vshrl.u32 %v1150, 7
        %v1152 = vsub.s32 0, %v1151
        %v1153 = vrot.slane %v710, %v1152
        %v1154 = vlaneseq
        %v1155 = vshrl.u32 %v1154, 7
        %v1156 = vsub.s32 1, %v1155
        %v1157 = vrot.slane %v710, %v1156
        %v1158 = vlaneseq
        %v1159 = vshrl.u32 %v1158, 7
        %v1160 = vsub.s32 0, %v1159
        %v1161 = vrot.slane %v712, %v1160
        %v1162 = vlaneseq
        %v1163 = vshrl.u32 %v1162, 7
        %v1164 = vsub.s32 1, %v1163
        %v1165 = vrot.slane %v712, %v1164
        %v1166 = vlaneseq
        %v1167 = vshrl.u32 %v1166, 7
        %v1168 = vsub.s32 0, %v1167
        %v1169 = vrot.slane %v695, %v1168
        %v1170 = vlaneseq
        %v1171 = vshrl.u32 %v1170, 7
        %v1172 = vsub.s32 1, %v1171
        %v1173 = vrot.slane %v695, %v1172
        %v1174 = vlaneseq
        %v1175 = vshrl.u32 %v1174, 7
        %v1176 = vsub.s32 0, %v1175
        %v1177 = vrot.slane %v709, %v1176
        %v1178 = vlaneseq
        %v1179 = vshrl.u32 %v1178, 7
        %v1180 = vsub.s32 1, %v1179
        %v1181 = vrot.slane %v709, %v1180
        %v1182 = vlaneseq
        %v1183 = vshrl.u32 %v1182, 7
        %v1184 = vsub.s32 0, %v1183
        %v1185 = vrot.slane %v711, %v1184
        %v1186 = vlaneseq
        %v1187 = vshrl.u32 %v1186, 7
        %v1188 = vsub.s32 1, %v1187
        %v1189 = vrot.slane %v711, %v1188
        %v1190 = vlaneseq
        %v1191 = vshrl.u32 %v1190, 7
        %v1192 = vsub.s32 0, %v1191
        %v1193 = vrot.slane %v713, %v1192
        %v1194 = vlaneseq
        %v1195 = vshrl.u32 %v1194, 7
        %v1196 = vsub.s32 1, %v1195
        %v1197 = vrot.slane %v713, %v1196
        %v1198 = vlaneseq
        %v1199 = vshrl.u32 %v1198, 7
        %v1200 = vsub.s32 0, %v1199
        %v1201 = vrot.slane %v738, %v1200
        %v1202 = vlaneseq
        %v1203 = vshrl.u32 %v1202, 7
        %v1204 = vsub.s32 1, %v1203
        %v1205 = vrot.slane %v738, %v1204
        %v1206 = vlaneseq
        %v1207 = vshrl.u32 %v1206, 7
        %v1208 = vsub.s32 0, %v1207
        %v1209 = vrot.slane %v752, %v1208
        %v1210 = vlaneseq
        %v1211 = vshrl.u32 %v1210, 7
        %v1212 = vsub.s32 1, %v1211
        %v1213 = vrot.slane %v752, %v1212
        %v1214 = vlaneseq
        %v1215 = vshrl.u32 %v1214, 7
        %v1216 = vsub.s32 0, %v1215
        %v1217 = vrot.slane %v760, %v1216
        %v1218 = vlaneseq
        %v1219 = vshrl.u32 %v1218, 7
        %v1220 = vsub.s32 1, %v1219
        %v1221 = vrot.slane %v760, %v1220
        %v1222 = vlaneseq
        %v1223 = vshrl.u32 %v1222, 7
        %v1224 = vsub.s32 0, %v1223
        %v1225 = vrot.slane %v762, %v1224
        %v1226 = vlaneseq
        %v1227 = vshrl.u32 %v1226, 7
        %v1228 = vsub.s32 1, %v1227
        %v1229 = vrot.slane %v762, %v1228
        %v1230 = vlaneseq
        %v1231 = vshrl.u32 %v1230, 7
        %v1232 = vsub.s32 0, %v1231
        %v1233 = vrot.slane %v745, %v1232
        %v1234 = vlaneseq
        %v1235 = vshrl.u32 %v1234, 7
        %v1236 = vsub.s32 1, %v1235
        %v1237 = vrot.slane %v745, %v1236
        %v1238 = vlaneseq
        %v1239 = vshrl.u32 %v1238, 7
        %v1240 = vsub.s32 0, %v1239
        %v1241 = vrot.slane %v759, %v1240
        %v1242 = vlaneseq
        %v1243 = vshrl.u32 %v1242, 7
        %v1244 = vsub.s32 1, %v1243
        %v1245 = vrot.slane %v759, %v1244
        %v1246 = vlaneseq
        %v1247 = vshrl.u32 %v1246, 7
        %v1248 = vsub.s32 0, %v1247
        %v1249 = vrot.slane %v761, %v1248
        %v1250 = vlaneseq
        %v1251 = vshrl.u32 %v1250, 7
        %v1252 = vsub.s32 1, %v1251
        %v1253 = vrot.slane %v761, %v1252
        %v1254 = vlaneseq
        %v1255 = vshrl.u32 %v1254, 7
        %v1256 = vsub.s32 0, %v1255
        %v1257 = vrot.slane %v763, %v1256
        %v1258 = vlaneseq
        %v1259 = vshrl.u32 %v1258, 7
        %v1260 = vsub.s32 1, %v1259
        %v1261 = vrot.slane %v763, %v1260
        %v1262 = vlaneseq
        %v1263 = vshrl.u32 %v1262, 7
        %v1264 = vsub.s32 0, %v1263
        %v1265 = vrot.slane %v788, %v1264
        %v1266 = vlaneseq
        %v1267 = vshrl.u32 %v1266, 7
        %v1268 = vsub.s32 1, %v1267
        %v1269 = vrot.slane %v788, %v1268
        %v1270 = vlaneseq
        %v1271 = vshrl.u32 %v1270, 7
        %v1272 = vsub.s32 0, %v1271
        %v1273 = vrot.slane %v802, %v1272
        %v1274 = vlaneseq
        %v1275 = vshrl.u32 %v1274, 7
        %v1276 = vsub.s32 1, %v1275
        %v1277 = vrot.slane %v802, %v1276
        %v1278 = vlaneseq
        %v1279 = vshrl.u32 %v1278, 7
        %v1280 = vsub.s32 0, %v1279
        %v1281 = vrot.slane %v810, %v1280
        %v1282 = vlaneseq
        %v1283 = vshrl.u32 %v1282, 7
        %v1284 = vsub.s32 1, %v1283
        %v1285 = vrot.slane %v810, %v1284
        %v1286 = vlaneseq
        %v1287 = vshrl.u32 %v1286, 7
        %v1288 = vsub.s32 0, %v1287
        %v1289 = vrot.slane %v812, %v1288
        %v1290 = vlaneseq
        %v1291 = vshrl.u32 %v1290, 7
        %v1292 = vsub.s32 1, %v1291
        %v1293 = vrot.slane %v812, %v1292
        %v1294 = vlaneseq
        %v1295 = vshrl.u32 %v1294, 7
        %v1296 = vsub.s32 0, %v1295
        %v1297 = vrot.slane %v795, %v1296
        %v1298 = vlaneseq
        %v1299 = vshrl.u32 %v1298, 7
        %v1300 = vsub.s32 1, %v1299
        %v1301 = vrot.slane %v795, %v1300
        %v1302 = vlaneseq
        %v1303 = vshrl.u32 %v1302, 7
        %v1304 = vsub.s32 0, %v1303
        %v1305 = vrot.slane %v809, %v1304
        %v1306 = vlaneseq
        %v1307 = vshrl.u32 %v1306, 7
        %v1308 = vsub.s32 1, %v1307
        %v1309 = vrot.slane %v809, %v1308
        %v1310 = vlaneseq
        %v1311 = vshrl.u32 %v1310, 7
        %v1312 = vsub.s32 0, %v1311
        %v1313 = vrot.slane %v811, %v1312
        %v1314 = vlaneseq
        %v1315 = vshrl.u32 %v1314, 7
        %v1316 = vsub.s32 1, %v1315
        %v1317 = vrot.slane %v811, %v1316
        %v1318 = vlaneseq
        %v1319 = vshrl.u32 %v1318, 7
        %v1320 = vsub.s32 0, %v1319
        %v1321 = vrot.slane %v813, %v1320
        %v1322 = vlaneseq
        %v1323 = vshrl.u32 %v1322, 7
        %v1324 = vsub.s32 1, %v1323
        %v1325 = vrot.slane %v813, %v1324
        %vm1454 = vcmask 1040384
        %v1455 = vsel %vm1454, %v817, -inf
        %v1456 = vsel %vm1454, %v821, -inf
        %v1457 = vmax.f32 %v1455, %v1456
        %1458 = vmax.xlane.f32.xlu0 %v1457
        %v1459 = vpop.xlane.xlu0 %1458
        %v1460 = vsel %vm1454, %v825, -inf
        %v1461 = vsel %vm1454, %v829, -inf
        %v1462 = vmax.f32 %v1460, %v1461
        %1463 = vmax.xlane.f32.xlu0 %v1462
        %v1464 = vpop.xlane.xlu0 %1463
        %v1465 = vsel %vm1454, %v833, -inf
        %v1466 = vsel %vm1454, %v837, -inf
        %v1467 = vmax.f32 %v1465, %v1466
        %1468 = vmax.xlane.f32.xlu0 %v1467
        %v1469 = vpop.xlane.xlu0 %1468
        %v1470 = vsel %vm1454, %v841, -inf
        %v1471 = vsel %vm1454, %v845, -inf
        %v1472 = vmax.f32 %v1470, %v1471
        %1473 = vmax.xlane.f32.xlu0 %v1472
        %v1474 = vpop.xlane.xlu0 %1473
        %v1475 = vsel %vm1454, %v849, -inf
        %v1476 = vsel %vm1454, %v853, -inf
        %v1477 = vmax.f32 %v1475, %v1476
        %1478 = vmax.xlane.f32.xlu0 %v1477
        %v1479 = vpop.xlane.xlu0 %1478
        %v1480 = vsel %vm1454, %v857, -inf
        %v1481 = vsel %vm1454, %v861, -inf
        %v1482 = vmax.f32 %v1480, %v1481
        %1483 = vmax.xlane.f32.xlu0 %v1482
        %v1484 = vpop.xlane.xlu0 %1483
        %v1485 = vsel %vm1454, %v865, -inf
        %v1486 = vsel %vm1454, %v869, -inf
        %v1487 = vmax.f32 %v1485, %v1486
        %1488 = vmax.xlane.f32.xlu0 %v1487
        %v1489 = vpop.xlane.xlu0 %1488
        %v1490 = vsel %vm1454, %v873, -inf
        %v1491 = vsel %vm1454, %v877, -inf
        %v1492 = vmax.f32 %v1490, %v1491
        %1493 = vmax.xlane.f32.xlu0 %v1492
        %v1494 = vpop.xlane.xlu0 %1493
        %v1495 = vsel %vm1454, %v881, -inf
        %v1496 = vsel %vm1454, %v885, -inf
        %v1497 = vmax.f32 %v1495, %v1496
        %1498 = vmax.xlane.f32.xlu0 %v1497
        %v1499 = vpop.xlane.xlu0 %1498
        %v1500 = vsel %vm1454, %v889, -inf
        %v1501 = vsel %vm1454, %v893, -inf
        %v1502 = vmax.f32 %v1500, %v1501
        %1503 = vmax.xlane.f32.xlu0 %v1502
        %v1504 = vpop.xlane.xlu0 %1503
        %v1505 = vsel %vm1454, %v897, -inf
        %v1506 = vsel %vm1454, %v901, -inf
        %v1507 = vmax.f32 %v1505, %v1506
        %1508 = vmax.xlane.f32.xlu0 %v1507
        %v1509 = vpop.xlane.xlu0 %1508
        %v1510 = vsel %vm1454, %v905, -inf
        %v1511 = vsel %vm1454, %v909, -inf
        %v1512 = vmax.f32 %v1510, %v1511
        %1513 = vmax.xlane.f32.xlu0 %v1512
        %v1514 = vpop.xlane.xlu0 %1513
        %v1515 = vsel %vm1454, %v913, -inf
        %v1516 = vsel %vm1454, %v917, -inf
        %v1517 = vmax.f32 %v1515, %v1516
        %1518 = vmax.xlane.f32.xlu0 %v1517
        %v1519 = vpop.xlane.xlu0 %1518
        %v1520 = vsel %vm1454, %v921, -inf
        %v1521 = vsel %vm1454, %v925, -inf
        %v1522 = vmax.f32 %v1520, %v1521
        %1523 = vmax.xlane.f32.xlu0 %v1522
        %v1524 = vpop.xlane.xlu0 %1523
        %v1525 = vsel %vm1454, %v929, -inf
        %v1526 = vsel %vm1454, %v933, -inf
        %v1527 = vmax.f32 %v1525, %v1526
        %1528 = vmax.xlane.f32.xlu0 %v1527
        %v1529 = vpop.xlane.xlu0 %1528
        %v1530 = vsel %vm1454, %v937, -inf
        %v1531 = vsel %vm1454, %v941, -inf
        %v1532 = vmax.f32 %v1530, %v1531
        %1533 = vmax.xlane.f32.xlu0 %v1532
        %v1534 = vpop.xlane.xlu0 %1533
        %v1535 = vsel %vm1454, %v945, -inf
        %v1536 = vsel %vm1454, %v949, -inf
        %v1537 = vmax.f32 %v1535, %v1536
        %1538 = vmax.xlane.f32.xlu0 %v1537
        %v1539 = vpop.xlane.xlu0 %1538
        %v1540 = vsel %vm1454, %v953, -inf
        %v1541 = vsel %vm1454, %v957, -inf
        %v1542 = vmax.f32 %v1540, %v1541
        %1543 = vmax.xlane.f32.xlu0 %v1542
        %v1544 = vpop.xlane.xlu0 %1543
        %v1545 = vsel %vm1454, %v961, -inf
        %v1546 = vsel %vm1454, %v965, -inf
        %v1547 = vmax.f32 %v1545, %v1546
        %1548 = vmax.xlane.f32.xlu0 %v1547
        %v1549 = vpop.xlane.xlu0 %1548
        %v1550 = vsel %vm1454, %v969, -inf
        %v1551 = vsel %vm1454, %v973, -inf
        %v1552 = vmax.f32 %v1550, %v1551
        %1553 = vmax.xlane.f32.xlu0 %v1552
        %v1554 = vpop.xlane.xlu0 %1553
        %v1555 = vsel %vm1454, %v977, -inf
        %v1556 = vsel %vm1454, %v981, -inf
        %v1557 = vmax.f32 %v1555, %v1556
        %1558 = vmax.xlane.f32.xlu0 %v1557
        %v1559 = vpop.xlane.xlu0 %1558
        %v1560 = vsel %vm1454, %v985, -inf
        %v1561 = vsel %vm1454, %v989, -inf
        %v1562 = vmax.f32 %v1560, %v1561
        %1563 = vmax.xlane.f32.xlu0 %v1562
        %v1564 = vpop.xlane.xlu0 %1563
        %v1565 = vsel %vm1454, %v993, -inf
        %v1566 = vsel %vm1454, %v997, -inf
        %v1567 = vmax.f32 %v1565, %v1566
        %1568 = vmax.xlane.f32.xlu0 %v1567
        %v1569 = vpop.xlane.xlu0 %1568
        %v1570 = vsel %vm1454, %v1001, -inf
        %v1571 = vsel %vm1454, %v1005, -inf
        %v1572 = vmax.f32 %v1570, %v1571
        %1573 = vmax.xlane.f32.xlu0 %v1572
        %v1574 = vpop.xlane.xlu0 %1573
        %v1575 = vsel %vm1454, %v1009, -inf
        %v1576 = vsel %vm1454, %v1013, -inf
        %v1577 = vmax.f32 %v1575, %v1576
        %1578 = vmax.xlane.f32.xlu0 %v1577
        %v1579 = vpop.xlane.xlu0 %1578
        %v1580 = vsel %vm1454, %v1017, -inf
        %v1581 = vsel %vm1454, %v1021, -inf
        %v1582 = vmax.f32 %v1580, %v1581
        %1583 = vmax.xlane.f32.xlu0 %v1582
        %v1584 = vpop.xlane.xlu0 %1583
        %v1585 = vsel %vm1454, %v1025, -inf
        %v1586 = vsel %vm1454, %v1029, -inf
        %v1587 = vmax.f32 %v1585, %v1586
        %1588 = vmax.xlane.f32.xlu0 %v1587
        %v1589 = vpop.xlane.xlu0 %1588
        %v1590 = vsel %vm1454, %v1033, -inf
        %v1591 = vsel %vm1454, %v1037, -inf
        %v1592 = vmax.f32 %v1590, %v1591
        %1593 = vmax.xlane.f32.xlu0 %v1592
        %v1594 = vpop.xlane.xlu0 %1593
        %v1595 = vsel %vm1454, %v1041, -inf
        %v1596 = vsel %vm1454, %v1045, -inf
        %v1597 = vmax.f32 %v1595, %v1596
        %1598 = vmax.xlane.f32.xlu0 %v1597
        %v1599 = vpop.xlane.xlu0 %1598
        %v1600 = vsel %vm1454, %v1049, -inf
        %v1601 = vsel %vm1454, %v1053, -inf
        %v1602 = vmax.f32 %v1600, %v1601
        %1603 = vmax.xlane.f32.xlu0 %v1602
        %v1604 = vpop.xlane.xlu0 %1603
        %v1605 = vsel %vm1454, %v1057, -inf
        %v1606 = vsel %vm1454, %v1061, -inf
        %v1607 = vmax.f32 %v1605, %v1606
        %1608 = vmax.xlane.f32.xlu0 %v1607
        %v1609 = vpop.xlane.xlu0 %1608
        %v1610 = vsel %vm1454, %v1065, -inf
        %v1611 = vsel %vm1454, %v1069, -inf
        %v1612 = vmax.f32 %v1610, %v1611
        %1613 = vmax.xlane.f32.xlu0 %v1612
        %v1614 = vpop.xlane.xlu0 %1613
        %v1615 = vsel %vm1454, %v1073, -inf
        %v1616 = vsel %vm1454, %v1077, -inf
        %v1617 = vmax.f32 %v1615, %v1616
        %1618 = vmax.xlane.f32.xlu0 %v1617
        %v1619 = vpop.xlane.xlu0 %1618
        %v1620 = vsel %vm1454, %v1081, -inf
        %v1621 = vsel %vm1454, %v1085, -inf
        %v1622 = vmax.f32 %v1620, %v1621
        %1623 = vmax.xlane.f32.xlu0 %v1622
        %v1624 = vpop.xlane.xlu0 %1623
        %v1625 = vsel %vm1454, %v1089, -inf
        %v1626 = vsel %vm1454, %v1093, -inf
        %v1627 = vmax.f32 %v1625, %v1626
        %1628 = vmax.xlane.f32.xlu0 %v1627
        %v1629 = vpop.xlane.xlu0 %1628
        %v1630 = vsel %vm1454, %v1097, -inf
        %v1631 = vsel %vm1454, %v1101, -inf
        %v1632 = vmax.f32 %v1630, %v1631
        %1633 = vmax.xlane.f32.xlu0 %v1632
        %v1634 = vpop.xlane.xlu0 %1633
        %v1635 = vsel %vm1454, %v1105, -inf
        %v1636 = vsel %vm1454, %v1109, -inf
        %v1637 = vmax.f32 %v1635, %v1636
        %1638 = vmax.xlane.f32.xlu0 %v1637
        %v1639 = vpop.xlane.xlu0 %1638
        %v1640 = vsel %vm1454, %v1113, -inf
        %v1641 = vsel %vm1454, %v1117, -inf
        %v1642 = vmax.f32 %v1640, %v1641
        %1643 = vmax.xlane.f32.xlu0 %v1642
        %v1644 = vpop.xlane.xlu0 %1643
        %v1645 = vsel %vm1454, %v1121, -inf
        %v1646 = vsel %vm1454, %v1125, -inf
        %v1647 = vmax.f32 %v1645, %v1646
        %1648 = vmax.xlane.f32.xlu0 %v1647
        %v1649 = vpop.xlane.xlu0 %1648
        %v1650 = vsel %vm1454, %v1129, -inf
        %v1651 = vsel %vm1454, %v1133, -inf
        %v1652 = vmax.f32 %v1650, %v1651
        %1653 = vmax.xlane.f32.xlu0 %v1652
        %v1654 = vpop.xlane.xlu0 %1653
        %v1655 = vsel %vm1454, %v1137, -inf
        %v1656 = vsel %vm1454, %v1141, -inf
        %v1657 = vmax.f32 %v1655, %v1656
        %1658 = vmax.xlane.f32.xlu0 %v1657
        %v1659 = vpop.xlane.xlu0 %1658
        %v1660 = vsel %vm1454, %v1145, -inf
        %v1661 = vsel %vm1454, %v1149, -inf
        %v1662 = vmax.f32 %v1660, %v1661
        %1663 = vmax.xlane.f32.xlu0 %v1662
        %v1664 = vpop.xlane.xlu0 %1663
        %v1665 = vsel %vm1454, %v1153, -inf
        %v1666 = vsel %vm1454, %v1157, -inf
        %v1667 = vmax.f32 %v1665, %v1666
        %1668 = vmax.xlane.f32.xlu0 %v1667
        %v1669 = vpop.xlane.xlu0 %1668
        %v1670 = vsel %vm1454, %v1161, -inf
        %v1671 = vsel %vm1454, %v1165, -inf
        %v1672 = vmax.f32 %v1670, %v1671
        %1673 = vmax.xlane.f32.xlu0 %v1672
        %v1674 = vpop.xlane.xlu0 %1673
        %v1675 = vsel %vm1454, %v1169, -inf
        %v1676 = vsel %vm1454, %v1173, -inf
        %v1677 = vmax.f32 %v1675, %v1676
        %1678 = vmax.xlane.f32.xlu0 %v1677
        %v1679 = vpop.xlane.xlu0 %1678
        %v1680 = vsel %vm1454, %v1177, -inf
        %v1681 = vsel %vm1454, %v1181, -inf
        %v1682 = vmax.f32 %v1680, %v1681
        %1683 = vmax.xlane.f32.xlu0 %v1682
        %v1684 = vpop.xlane.xlu0 %1683
        %v1685 = vsel %vm1454, %v1185, -inf
        %v1686 = vsel %vm1454, %v1189, -inf
        %v1687 = vmax.f32 %v1685, %v1686
        %1688 = vmax.xlane.f32.xlu0 %v1687
        %v1689 = vpop.xlane.xlu0 %1688
        %v1690 = vsel %vm1454, %v1193, -inf
        %v1691 = vsel %vm1454, %v1197, -inf
        %v1692 = vmax.f32 %v1690, %v1691
        %1693 = vmax.xlane.f32.xlu0 %v1692
        %v1694 = vpop.xlane.xlu0 %1693
        %v1695 = vsel %vm1454, %v1201, -inf
        %v1696 = vsel %vm1454, %v1205, -inf
        %v1697 = vmax.f32 %v1695, %v1696
        %1698 = vmax.xlane.f32.xlu0 %v1697
        %v1699 = vpop.xlane.xlu0 %1698
        %v1700 = vsel %vm1454, %v1209, -inf
        %v1701 = vsel %vm1454, %v1213, -inf
        %v1702 = vmax.f32 %v1700, %v1701
        %1703 = vmax.xlane.f32.xlu0 %v1702
        %v1704 = vpop.xlane.xlu0 %1703
        %v1705 = vsel %vm1454, %v1217, -inf
        %v1706 = vsel %vm1454, %v1221, -inf
        %v1707 = vmax.f32 %v1705, %v1706
        %1708 = vmax.xlane.f32.xlu0 %v1707
        %v1709 = vpop.xlane.xlu0 %1708
        %v1710 = vsel %vm1454, %v1225, -inf
        %v1711 = vsel %vm1454, %v1229, -inf
        %v1712 = vmax.f32 %v1710, %v1711
        %1713 = vmax.xlane.f32.xlu0 %v1712
        %v1714 = vpop.xlane.xlu0 %1713
        %v1715 = vsel %vm1454, %v1233, -inf
        %v1716 = vsel %vm1454, %v1237, -inf
        %v1717 = vmax.f32 %v1715, %v1716
        %1718 = vmax.xlane.f32.xlu0 %v1717
        %v1719 = vpop.xlane.xlu0 %1718
        %v1720 = vsel %vm1454, %v1241, -inf
        %v1721 = vsel %vm1454, %v1245, -inf
        %v1722 = vmax.f32 %v1720, %v1721
        %1723 = vmax.xlane.f32.xlu0 %v1722
        %v1724 = vpop.xlane.xlu0 %1723
        %v1725 = vsel %vm1454, %v1249, -inf
        %v1726 = vsel %vm1454, %v1253, -inf
        %v1727 = vmax.f32 %v1725, %v1726
        %1728 = vmax.xlane.f32.xlu0 %v1727
        %v1729 = vpop.xlane.xlu0 %1728
        %v1730 = vsel %vm1454, %v1257, -inf
        %v1731 = vsel %vm1454, %v1261, -inf
        %v1732 = vmax.f32 %v1730, %v1731
        %1733 = vmax.xlane.f32.xlu0 %v1732
        %v1734 = vpop.xlane.xlu0 %1733
        %v1735 = vsel %vm1454, %v1265, -inf
        %v1736 = vsel %vm1454, %v1269, -inf
        %v1737 = vmax.f32 %v1735, %v1736
        %1738 = vmax.xlane.f32.xlu0 %v1737
        %v1739 = vpop.xlane.xlu0 %1738
        %v1740 = vsel %vm1454, %v1273, -inf
        %v1741 = vsel %vm1454, %v1277, -inf
        %v1742 = vmax.f32 %v1740, %v1741
        %1743 = vmax.xlane.f32.xlu0 %v1742
        %v1744 = vpop.xlane.xlu0 %1743
        %v1745 = vsel %vm1454, %v1281, -inf
        %v1746 = vsel %vm1454, %v1285, -inf
        %v1747 = vmax.f32 %v1745, %v1746
        %1748 = vmax.xlane.f32.xlu0 %v1747
        %v1749 = vpop.xlane.xlu0 %1748
        %v1750 = vsel %vm1454, %v1289, -inf
        %v1751 = vsel %vm1454, %v1293, -inf
        %v1752 = vmax.f32 %v1750, %v1751
        %1753 = vmax.xlane.f32.xlu0 %v1752
        %v1754 = vpop.xlane.xlu0 %1753
        %v1755 = vsel %vm1454, %v1297, -inf
        %v1756 = vsel %vm1454, %v1301, -inf
        %v1757 = vmax.f32 %v1755, %v1756
        %1758 = vmax.xlane.f32.xlu0 %v1757
        %v1759 = vpop.xlane.xlu0 %1758
        %v1760 = vsel %vm1454, %v1305, -inf
        %v1761 = vsel %vm1454, %v1309, -inf
        %v1762 = vmax.f32 %v1760, %v1761
        %1763 = vmax.xlane.f32.xlu0 %v1762
        %v1764 = vpop.xlane.xlu0 %1763
        %v1765 = vsel %vm1454, %v1313, -inf
        %v1766 = vsel %vm1454, %v1317, -inf
        %v1767 = vmax.f32 %v1765, %v1766
        %1768 = vmax.xlane.f32.xlu0 %v1767
        %v1769 = vpop.xlane.xlu0 %1768
        %v1770 = vsel %vm1454, %v1321, -inf
        %v1771 = vsel %vm1454, %v1325, -inf
        %v1772 = vmax.f32 %v1770, %v1771
        %1773 = vmax.xlane.f32.xlu0 %v1772
        %v1774 = vpop.xlane.xlu0 %1773
        %v1839 = vrot.slane %v1464, 7
        %vm1840 = vcmask 1041409
        %v1841 = vsel %vm1840, %v1839, %v1459
        %v1842 = vrot.slane %v1469, 6
        %vm1843 = vcmask 1042434
        %v1844 = vsel %vm1843, %v1842, %v1841
        %v1845 = vrot.slane %v1474, 5
        %vm1846 = vcmask 1043459
        %v1847 = vsel %vm1846, %v1845, %v1844
        %v1848 = vrot.slane %v1479, 4
        %vm1849 = vcmask 1044484
        %v1850 = vsel %vm1849, %v1848, %v1847
        %v1851 = vrot.slane %v1484, 3
        %vm1852 = vcmask 1045509
        %v1853 = vsel %vm1852, %v1851, %v1850
        %v1854 = vrot.slane %v1489, 2
        %vm1855 = vcmask 1046534
        %v1856 = vsel %vm1855, %v1854, %v1853
        %v1857 = vrot.slane %v1494, 1
        %vm1858 = vcmask 1047559
        %v1859 = vsel %vm1858, %v1857, %v1856
        %v1860 = vrot.slane %v1504, 7
        %v1861 = vsel %vm1840, %v1860, %v1499
        %v1862 = vrot.slane %v1509, 6
        %v1863 = vsel %vm1843, %v1862, %v1861
        %v1864 = vrot.slane %v1514, 5
        %v1865 = vsel %vm1846, %v1864, %v1863
        %v1866 = vrot.slane %v1519, 4
        %v1867 = vsel %vm1849, %v1866, %v1865
        %v1868 = vrot.slane %v1524, 3
        %v1869 = vsel %vm1852, %v1868, %v1867
        %v1870 = vrot.slane %v1529, 2
        %v1871 = vsel %vm1855, %v1870, %v1869
        %v1872 = vrot.slane %v1534, 1
        %v1873 = vsel %vm1858, %v1872, %v1871
        %v1874 = vrot.slane %v1544, 7
        %v1875 = vsel %vm1840, %v1874, %v1539
        %v1876 = vrot.slane %v1549, 6
        %v1877 = vsel %vm1843, %v1876, %v1875
        %v1878 = vrot.slane %v1554, 5
        %v1879 = vsel %vm1846, %v1878, %v1877
        %v1880 = vrot.slane %v1559, 4
        %v1881 = vsel %vm1849, %v1880, %v1879
        %v1882 = vrot.slane %v1564, 3
        %v1883 = vsel %vm1852, %v1882, %v1881
        %v1884 = vrot.slane %v1569, 2
        %v1885 = vsel %vm1855, %v1884, %v1883
        %v1886 = vrot.slane %v1574, 1
        %v1887 = vsel %vm1858, %v1886, %v1885
        %v1888 = vrot.slane %v1584, 7
        %v1889 = vsel %vm1840, %v1888, %v1579
        %v1890 = vrot.slane %v1589, 6
        %v1891 = vsel %vm1843, %v1890, %v1889
        %v1892 = vrot.slane %v1594, 5
        %v1893 = vsel %vm1846, %v1892, %v1891
        %v1894 = vrot.slane %v1599, 4
        %v1895 = vsel %vm1849, %v1894, %v1893
        %v1896 = vrot.slane %v1604, 3
        %v1897 = vsel %vm1852, %v1896, %v1895
        %v1898 = vrot.slane %v1609, 2
        %v1899 = vsel %vm1855, %v1898, %v1897
        %v1900 = vrot.slane %v1614, 1
        %v1901 = vsel %vm1858, %v1900, %v1899
        %v1902 = vrot.slane %v1624, 7
        %v1903 = vsel %vm1840, %v1902, %v1619
        %v1904 = vrot.slane %v1629, 6
        %v1905 = vsel %vm1843, %v1904, %v1903
        %v1906 = vrot.slane %v1634, 5
        %v1907 = vsel %vm1846, %v1906, %v1905
        %v1908 = vrot.slane %v1639, 4
        %v1909 = vsel %vm1849, %v1908, %v1907
        %v1910 = vrot.slane %v1644, 3
        %v1911 = vsel %vm1852, %v1910, %v1909
        %v1912 = vrot.slane %v1649, 2
        %v1913 = vsel %vm1855, %v1912, %v1911
        %v1914 = vrot.slane %v1654, 1
        %v1915 = vsel %vm1858, %v1914, %v1913
        %v1916 = vrot.slane %v1664, 7
        %v1917 = vsel %vm1840, %v1916, %v1659
        %v1918 = vrot.slane %v1669, 6
        %v1919 = vsel %vm1843, %v1918, %v1917
        %v1920 = vrot.slane %v1674, 5
        %v1921 = vsel %vm1846, %v1920, %v1919
        %v1922 = vrot.slane %v1679, 4
        %v1923 = vsel %vm1849, %v1922, %v1921
        %v1924 = vrot.slane %v1684, 3
        %v1925 = vsel %vm1852, %v1924, %v1923
        %v1926 = vrot.slane %v1689, 2
        %v1927 = vsel %vm1855, %v1926, %v1925
        %v1928 = vrot.slane %v1694, 1
        %v1929 = vsel %vm1858, %v1928, %v1927
        %v1930 = vrot.slane %v1704, 7
        %v1931 = vsel %vm1840, %v1930, %v1699
        %v1932 = vrot.slane %v1709, 6
        %v1933 = vsel %vm1843, %v1932, %v1931
        %v1934 = vrot.slane %v1714, 5
        %v1935 = vsel %vm1846, %v1934, %v1933
        %v1936 = vrot.slane %v1719, 4
        %v1937 = vsel %vm1849, %v1936, %v1935
        %v1938 = vrot.slane %v1724, 3
        %v1939 = vsel %vm1852, %v1938, %v1937
        %v1940 = vrot.slane %v1729, 2
        %v1941 = vsel %vm1855, %v1940, %v1939
        %v1942 = vrot.slane %v1734, 1
        %v1943 = vsel %vm1858, %v1942, %v1941
        %v1944 = vrot.slane %v1744, 7
        %v1945 = vsel %vm1840, %v1944, %v1739
        %v1946 = vrot.slane %v1749, 6
        %v1947 = vsel %vm1843, %v1946, %v1945
        %v1948 = vrot.slane %v1754, 5
        %v1949 = vsel %vm1846, %v1948, %v1947
        %v1950 = vrot.slane %v1759, 4
        %v1951 = vsel %vm1849, %v1950, %v1949
        %v1952 = vrot.slane %v1764, 3
        %v1953 = vsel %vm1852, %v1952, %v1951
        %v1954 = vrot.slane %v1769, 2
        %v1955 = vsel %vm1855, %v1954, %v1953
        %v1956 = vrot.slane %v1774, 1
        %v1957 = vsel %vm1858, %v1956, %v1955
        %1966 = vxpose.xlu0.b32.start [1/16] %v1859, 128
        %1967 = vxpose.xlu0.b32.cont [2/16] %v1873, 128
        %1968 = vxpose.xlu0.b32.cont [3/16] %v1887, 128
        %1969 = vxpose.xlu0.b32.cont [4/16] %v1901, 128
        %1970 = vxpose.xlu0.b32.cont [5/16] %v1915, 128
        %1971 = vxpose.xlu0.b32.cont [6/16] %v1929, 128
        %1972 = vxpose.xlu0.b32.cont [7/16] %v1943, 128
        %1973 = vxpose.xlu0.b32.cont [8/16] %v1957, 128
        %1974 = vxpose.xlu0.b32.cont [9/16] 0.0, 128
        %1975 = vxpose.xlu0.b32.cont [10/16] 0.0, 128
        %1976 = vxpose.xlu0.b32.cont [11/16] 0.0, 128
        %1977 = vxpose.xlu0.b32.cont [12/16] 0.0, 128
        %1978 = vxpose.xlu0.b32.cont [13/16] 0.0, 128
        %1979 = vxpose.xlu0.b32.cont [14/16] 0.0, 128
        %1980 = vxpose.xlu0.b32.cont [15/16] 0.0, 128
        %1981 = vxpose.xlu0.b32.end [16/16] 0.0, 128
        %v1982 = vpop.trf.xlu0
        %v1983 = vpop.trf.xlu0
        %v1984 = vpop.trf.xlu0
        %v1985 = vpop.trf.xlu0
        %v1986 = vpop.trf.xlu0
        %v1987 = vpop.trf.xlu0
        %v1988 = vpop.trf.xlu0
        %v1989 = vpop.trf.xlu0
        %v1990 = vpop.trf.xlu0
        %v1991 = vpop.trf.xlu0
        %v1992 = vpop.trf.xlu0
        %v1993 = vpop.trf.xlu0
        %v1994 = vpop.trf.xlu0
        %v1995 = vpop.trf.xlu0
        %v1996 = vpop.trf.xlu0
        %v1997 = vpop.trf.xlu0
        %v1998 = vld [vmem:[%s2] sm:$0x1]
        %v1999 = vadd.f32 %v1982, %v1998
        %v2000 = vmax.f32 %v1999, 0.0
        %v2001 = vld [vmem:[%s3] sm:$0xff]
        %v2002 = vld [vmem:[%s3 + $0x8] sm:$0xff]
        %v2003 = vld [vmem:[%s3 + $0x10] sm:$0xff]
        %v2004 = vld [vmem:[%s3 + $0x18] sm:$0xff]
        %v2005 = vld [vmem:[%s3 + $0x20] sm:$0xff]
        %v2006 = vld [vmem:[%s3 + $0x28] sm:$0xff]
        %v2007 = vld [vmem:[%s3 + $0x30] sm:$0xff]
        %v2008 = vld [vmem:[%s3 + $0x38] sm:$0xff]
        %v2009 = vld [vmem:[%s4] sm:$0x1]
        %vm2010 = vcmask 523264
        %v2012 = vsel %vm2010, %v2000, 0
        %2014 = vmatprep.subr.mxu0 0.0
        %2015 = vmatpush1.msra.mxu0 %v2001
        %2016 = vmatprep.subr.mxu0 0.0
        %2017 = vmatpush1.msra.mxu0 %v2002
        %2018 = vmatprep.subr.mxu0 0.0
        %2019 = vmatpush1.msra.mxu0 %v2003
        %2020 = vmatprep.subr.mxu0 0.0
        %2021 = vmatpush1.msra.mxu0 %v2004
        %2022 = vmatprep.subr.mxu0 0.0
        %2023 = vmatpush1.msra.mxu0 %v2005
        %2024 = vmatprep.subr.mxu0 0.0
        %2025 = vmatpush1.msra.mxu0 %v2006
        %2026 = vmatprep.subr.mxu0 0.0
        %2027 = vmatpush1.msra.mxu0 %v2007
        %2028 = vmatprep.subr.mxu0 0.0
        %2029 = vmatpush1.msra.mxu0 %v2008
        %2030 = vmatprep.subr.mxu0 0.0
        %2031 = vmatpush1.msra.mxu0 0.0
        %2032 = vmatprep.subr.mxu0 0.0
        %2033 = vmatpush1.msra.mxu0 0.0
        %2034 = vmatprep.subr.mxu0 0.0
        %2035 = vmatpush1.msra.mxu0 0.0
        %2036 = vmatprep.subr.mxu0 0.0
        %2037 = vmatpush1.msra.mxu0 0.0
        %2038 = vmatprep.subr.mxu0 0.0
        %2039 = vmatpush1.msra.mxu0 0.0
        %2040 = vmatprep.subr.mxu0 0.0
        %2041 = vmatpush1.msra.mxu0 0.0
        %2042 = vmatprep.subr.mxu0 0.0
        %2043 = vmatpush1.msra.mxu0 0.0
        %2044 = vmatprep.subr.mxu0 0.0
        %2045 = vmatpush1.msra.mxu0 0.0
        %2046 = vmatprep.subr.mxu0 0.0
        %2047 = vmatpush1.msra.mxu0 0.0
        %2048 = vmatprep.subr.mxu0 0.0
        %2049 = vmatpush1.msra.mxu0 0.0
        %2050 = vmatprep.subr.mxu0 0.0
        %2051 = vmatpush1.msra.mxu0 0.0
        %2052 = vmatprep.subr.mxu0 0.0
        %2053 = vmatpush1.msra.mxu0 0.0
        %2054 = vmatprep.subr.mxu0 0.0
        %2055 = vmatpush1.msra.mxu0 0.0
        %2056 = vmatprep.subr.mxu0 0.0
        %2057 = vmatpush1.msra.mxu0 0.0
        %2058 = vmatprep.subr.mxu0 0.0
        %2059 = vmatpush1.msra.mxu0 0.0
        %2060 = vmatprep.subr.mxu0 0.0
        %2061 = vmatpush1.msra.mxu0 0.0
        %2062 = vmatprep.subr.mxu0 0.0
        %2063 = vmatpush1.msra.mxu0 0.0
        %2064 = vmatprep.subr.mxu0 0.0
        %2065 = vmatpush1.msra.mxu0 0.0
        %2066 = vmatprep.subr.mxu0 0.0
        %2067 = vmatpush1.msra.mxu0 0.0
        %2068 = vmatprep.subr.mxu0 0.0
        %2069 = vmatpush1.msra.mxu0 0.0
        %2070 = vmatprep.subr.mxu0 0.0
        %2071 = vmatpush1.msra.mxu0 0.0
        %2072 = vmatprep.subr.mxu0 0.0
        %2073 = vmatpush1.msra.mxu0 0.0
        %2074 = vmatprep.subr.mxu0 0.0
        %2075 = vmatpush1.msra.mxu0 0.0
        %2076 = vmatprep.subr.mxu0 0.0
        %2077 = vmatpush1.msra.mxu0 0.0
        %2078 = vmatprep.mubr.f32.mxu0 0.0
        %2079 = vmatmul.mubr.f32.gmra.mrb[0].mxu0 %v2012
        %v2080 = vpop.f32.mrb[0].mxu0
        %v2081 = vadd.f32 %v2009, %v2080
        %v2082 = vpop.f32.mrb[0].mxu0
        %2083 = vdwg.mxu0
        %vm2084 = vcmp.gt.f32.partialorder %v2081, 0.0
        %v2085 = vmin.f32 %v2081, 0.0
        %v2086 = vmul.f32 %v2085, 1.442695
        %v2087 = vpow.pop %v2086
        %v2088 = vsub.f32 %v2087, 1.0
        %v2089 = vsel %vm2084, %v2081, %v2088
        %v2090 = vmul.f32 %v2000, 0.3
        %v2091 = vmul.f32 %v2089, 0.7
        %v2092 = vadd.f32 %v2090, %v2091
        %vm2093 = vcmask 516096
        %2094 = vst.msk [vmem:[%s241] sm:$0x1] %vm2093, %v2092
        %s2095 = sand.u32 %s140, 1
        %s2096 = scalar_lea.sflag [#allocation4], %s2095
        %s2097 = sand.u32 %s140, 1
        %s2098 = scalar_lea.vmem [#allocation5], %s2097
        // Predicated region
        $region45: #{tpu_custom_call.1} parent=39 // pred_check
          %p2099 = pneg %p150
        $region46: #{tpu_custom_call.1} parent=39 // pred_check_branch
          %2101 = sbr.rel (%p2099) target = $region48
        $region47: #{tpu_custom_call.1} parent=39 // pred_region
          %s2103 = ssub.s32 16, 16
          %2104 = vsyncadd %s2096, %s2103
          %s2105 = smul.addr %s22, 16
          %s2106 = scalar_lea.hbm %s5, %s2105
          %s2108 = sshll.u32 %s2098, 4
          %s2109 = int_to_ptr.vmem [resolvable:$true] %s2108
          %2111 = dma.vmem_to_hbm [thread:$0]  %s2109, 16, %s2106, %s2096
        $region48: #{tpu_custom_call.1} parent=39 // pred_fallthru
          _
      $region40: #{tpu_custom_call.1} parent=5 // pred_fallthru
        _
      %p2112 = scmp.le.s32.totalorder 2, %s17
      // Predicated region
      $region49: #{tpu_custom_call.1} parent=5 // pred_check
        %p2113 = pneg %p2112
      $region50: #{tpu_custom_call.1} parent=5 // pred_check_branch
        %2115 = sbr.rel (%p2113) target = $region52
      $region51: #{tpu_custom_call.1} parent=5 // pred_region
        %s2116 = ssub.s32 %s17, 2
        // Predicated region
        $region53: #{tpu_custom_call.1} parent=51 // pred_check
          %p2117 = pneg %p156
        $region54: #{tpu_custom_call.1} parent=51 // pred_check_branch
          %2119 = sbr.rel (%p2117) target = $region56
        $region55: #{tpu_custom_call.1} parent=51 // pred_region
          %s2120 = sand.u32 %s141, 1
          %s2121 = scalar_lea.sflag [#allocation4], %s2120
          %s2122 = sand.u32 %s141, 1
          %s2123 = scalar_lea.vmem [#allocation5], %s2122
          %2124 = dma.done %s2121, 16
        $region56: #{tpu_custom_call.1} parent=51 // pred_fallthru
          _
      $region52: #{tpu_custom_call.1} parent=5 // pred_fallthru
        _
    $region6: #{tpu_custom_call.1} parent=1 // loop_footer
      %s21 = sadd.s32 1, %s17
    $region7: #{tpu_custom_call.1} parent=1 // loop_footer_branch
      %16 = sbr.rel target = $region3
    $region8: #{tpu_custom_call.1} parent=1 // loop_exit
      _
    %2125 = vsyncpa [#allocation3], 1
    %s2126 = scalar_lea.sflag [#allocation3], 1
    %2127 = vsyncpa %s2126, 1
    %2128 = vsyncpa [#allocation4], 1
    %s2129 = scalar_lea.sflag [#allocation4], 1
    %2130 = vsyncpa %s2129, 1

</llo_original>
